<compile_context>
chip_gen: v7x
topology: tpu7x:2x2x1
jax: 0.10.0
libtpu: 0.0.40
codegen_flags: <defaults>
</compile_context>

<pallas_src>
import functools

import jax
import jax.numpy as jnp
from jax.experimental import pallas as pl
from jax.experimental.pallas import tpu as pltpu


def _round_up(x, m):
    return ((x + m - 1) // m) * m


def _pad2(a, rows, cols):
    return jnp.pad(a, ((0, rows - a.shape[0]), (0, cols - a.shape[1])))


def _pad_bias(b, cols):
    return jnp.pad(b, (0, cols - b.shape[0])).reshape(1, cols).astype(jnp.float32)


# --------------------------------------------------------------------------- #
# Kernels
# --------------------------------------------------------------------------- #
def _mlp_resident_kernel(*refs, n_mid):
    """Fused MLP on one (tm, F_pad) row tile; all weights resident in VMEM."""
    if n_mid > 0:
        x_ref, wh_ref, bh_ref, wm_ref, bm_ref, wo_ref, bo_ref, o_ref = refs
    else:
        x_ref, wh_ref, bh_ref, wo_ref, bo_ref, o_ref = refs
        wm_ref = bm_ref = None
    cdt = x_ref.dtype

    # hidden Linear + ReLU (+ Dropout = identity in eval mode)
    y = jnp.dot(x_ref[...], wh_ref[...], preferred_element_type=jnp.float32)
    h = jnp.maximum(y + bh_ref[...], 0.0).astype(cdt)

    # (n_layers - 1) x [Linear + ReLU + Dropout(identity)], statically unrolled.
    for i in range(n_mid):
        y = jnp.dot(h, wm_ref[i], preferred_element_type=jnp.float32)
        h = jnp.maximum(y + bm_ref[i], 0.0).astype(cdt)

    # Extra ReLU before the final Linear is idempotent -> folded away.
    y = jnp.dot(h, wo_ref[...], preferred_element_type=jnp.float32)
    o_ref[...] = (y + bo_ref[...]).astype(o_ref.dtype)


def _mlp_streaming_kernel(x_ref, wh_ref, bh_ref, wm_hbm, bm_ref, wo_ref, bo_ref,
                          o_ref, wbuf, sem, *, n_mid):
    """Fused MLP with mid-layer weights streamed HBM->VMEM (double-buffered)."""
    cdt = x_ref.dtype

    # Prefetch layer-0 weights while the hidden matmul runs.
    pltpu.make_async_copy(wm_hbm.at[0], wbuf.at[0], sem.at[0]).start()

    y = jnp.dot(x_ref[...], wh_ref[...], preferred_element_type=jnp.float32)
    h = jnp.maximum(y + bh_ref[...], 0.0).astype(cdt)

    for i in range(n_mid):
        slot = i % 2
        pltpu.make_async_copy(wm_hbm.at[i], wbuf.at[slot], sem.at[slot]).wait()
        if i + 1 < n_mid:  # prefetch next layer into the other slot
            pltpu.make_async_copy(wm_hbm.at[i + 1], wbuf.at[1 - slot],
                                  sem.at[1 - slot]).start()
        y = jnp.dot(h, wbuf[slot], preferred_element_type=jnp.float32)
        h = jnp.maximum(y + bm_ref[i], 0.0).astype(cdt)

    y = jnp.dot(h, wo_ref[...], preferred_element_type=jnp.float32)
    o_ref[...] = (y + bo_ref[...]).astype(o_ref.dtype)


# --------------------------------------------------------------------------- #
# Hardware query (generation-aware VMEM budget + multi-TensorCore detection)
# --------------------------------------------------------------------------- #
@functools.lru_cache(maxsize=1)
def _tpu_vmem_and_multicore():
    cap = None
    try:
        info = pltpu.get_tpu_info()
        cap = int(getattr(info, "vmem_capacity_bytes", 0)) or None
    except Exception:
        cap = None
    kind = ""
    try:
        kind = (getattr(jax.devices()[0], "device_kind", "") or "").lower()
    except Exception:
        pass
    multi_tc = any(t in kind for t in ("v7", "v4", "v5p"))
    if cap is None:
        if ("v6" in kind) or ("v5e" in kind) or ("lite" in kind):
            cap = 128 * 1024 * 1024
        else:
            cap = 64 * 1024 * 1024  # conservative (v7x per-TC VMEM)
    return cap, multi_tc


# --------------------------------------------------------------------------- #
# Parameter preparation (hoisted padding / casting / stacking)
# --------------------------------------------------------------------------- #
def prepare_mlp_params(params, compute_dtype=jnp.float32):
    """Pad/cast/stack weights once; reuse across calls for repeated inference."""
    if isinstance(params, dict) and params.get("_prepared", False):
        return params
    wh, bh = params["hidden"]
    mids = params["layers"]
    wo, bo = params["linear"]
    F, H = wh.shape
    O = wo.shape[1]
    n_mid = len(mids)
    F_pad, H_pad, O_pad = _round_up(F, 128), _round_up(H, 128), _round_up(O, 128)

    # Zero padding is exact: padded K rows/cols contribute 0; padded N columns
    # carry zero weight + zero bias -> ReLU(0)=0 feeds zero weights next layer.
    prep = {
        "_prepared": True,
        "compute_dtype": jnp.dtype(compute_dtype),
        "dims": (F, H, O, n_mid, F_pad, H_pad, O_pad),
        "wh": _pad2(wh, F_pad, H_pad).astype(compute_dtype),
        "bh": _pad_bias(bh, H_pad),
        "wo": _pad2(wo, H_pad, O_pad).astype(compute_dtype),
        "bo": _pad_bias(bo, O_pad),
    }
    if n_mid:
        prep["wm"] = jnp.stack(
            [_pad2(w, H_pad, H_pad) for (w, _) in mids]).astype(compute_dtype)
        prep["bm"] = jnp.stack([_pad_bias(b, H_pad) for (_, b) in mids])
    return prep


# --------------------------------------------------------------------------- #
# Forward
# --------------------------------------------------------------------------- #
def mlp_forward(params, x, pre_len, *, compute_dtype=jnp.float32,
                out_dtype=None, force_stream_mid=False):
    """Reproduces MLP.forward (eval mode: dropout = identity).

    x: (batch, obs_len, input_size) -> (batch, pre_len, output_size)
    `params` may be the raw dict or the result of prepare_mlp_params(...).
    """
    prep = prepare_mlp_params(params, compute_dtype)
    compute_dtype = jnp.dtype(prep["compute_dtype"])
    B, L, F_in = x.shape
    assert pre_len <= L
    out_dtype = jnp.dtype(out_dtype) if out_dtype is not None else jnp.dtype(x.dtype)

    F, H, O, n_mid, F_pad, H_pad, O_pad = prep["dims"]
    assert F_in == F

    # Slice FIRST (row-wise MLP => exact).
    xs = x[:, -pre_len:, :].reshape(B * pre_len, F)
    M = B * pre_len

    in_itemsize = compute_dtype.itemsize
    out_itemsize = out_dtype.itemsize

    vmem_cap, multi_tc = _tpu_vmem_and_multicore()
    budget = int(vmem_cap * 0.70)                       # planning budget
    vmem_limit = min(vmem_cap, max(32 * 1024 * 1024, int(vmem_cap * 0.85)))

    def weight_bytes(stream):
        wb = (F_pad * H_pad + H_pad * O_pad) * in_itemsize
        wb += ((n_mid + 1) * H_pad + O_pad) * 4         # f32 biases
        if n_mid:
            # resident stack vs. 2-deep streaming scratch
            wb += (2 if stream else n_mid) * H_pad * H_pad * in_itemsize
        return wb

    # Sublane packing: bf16 packs 2 rows/sublane -> 16-row granularity.
    gran = 8 * max(1, 4 // in_itemsize)
    m_ceil = _round_up(M, gran)

    def io_act_bytes(tm_):
        return (2 * tm_ * F_pad * in_itemsize            # double-buffered input tile
                + 2 * tm_ * O_pad * out_itemsize         # double-buffered output tile
                + tm_ * max(H_pad, O_pad) * 4            # live f32 matmul result
                + tm_ * H_pad * in_itemsize)             # live activation (cdt)

    # Decide resident vs. streaming mid-layer weights.
    stream = bool(force_stream_mid) and n_mid > 0
    if (not stream) and n_mid > 0:
        stream = weight_bytes(False) + io_act_bytes(gran) > budget
    wbytes = weight_bytes(stream)

    # M-tile selection: biggest feasible tile (256-aligned candidates first by
    # virtue of being larger); on multi-TC chips keep grid_m >= 2 when possible.
    candidates = sorted(
        {c for c in (2048, 1024, 512, 256, 128, 64, 32, 16, 8, gran, m_ceil)
         if gran <= c <= max(m_ceil, gran) and c % gran == 0},
        reverse=True)
    feasible = [c for c in candidates if wbytes + io_act_bytes(c) <= budget]
    if feasible:
        if multi_tc:
            two_core = [c for c in feasible if -(-M // c) >= 2]
            tm = two_core[0] if two_core else feasible[0]
        else:
            tm = feasible[0]
    else:
        tm = gran                    # best effort; open the limit fully
        vmem_limit = vmem_cap
    M_pad = _round_up(M, tm)
    grid_m = M_pad // tm

    # Input pad/cast only when needed (avoid an extra HBM copy of x).
    if M_pad == M and F_pad == F and xs.dtype == compute_dtype:
        xs_p = xs
    else:
        xs_p = jnp.pad(xs, ((0, M_pad - M), (0, F_pad - F))).astype(compute_dtype)

    operands = [xs_p, prep["wh"], prep["bh"]]
    if n_mid:
        operands += [prep["wm"], prep["bm"]]
    operands += [prep["wo"], prep["bo"]]

    if stream:
        kernel = functools.partial(_mlp_streaming_kernel, n_mid=n_mid)
        scratch_shapes = [pltpu.VMEM((2, H_pad, H_pad), compute_dtype),
                          pltpu.SemaphoreType.DMA((2,))]
    else:
        kernel = functools.partial(_mlp_resident_kernel, n_mid=n_mid)
        scratch_shapes = []

    flops = 2 * M_pad * (F_pad * H_pad + n_mid * H_pad * H_pad + H_pad * O_pad)
    bytes_accessed = int(sum(int(op.size) * op.dtype.itemsize for op in operands)
                         + M_pad * O_pad * out_itemsize)

    def build_in_specs(single_buffer_weights):
        wkw = dict(pipeline_mode=pl.Buffered(1)) if single_buffer_weights else {}

        def wspec(shape, imap):
            try:
                return pl.BlockSpec(shape, imap, **wkw)
            except TypeError:
                return pl.BlockSpec(shape, imap)

        specs = [pl.BlockSpec((tm, F_pad), lambda i: (i, 0)),
                 wspec((F_pad, H_pad), lambda i: (0, 0)),     # resident across grid
                 wspec((1, H_pad), lambda i: (0, 0))]
        if n_mid:
            if stream:
                specs.append(pl.BlockSpec(memory_space=pl.ANY))  # raw HBM ref
            else:
                specs.append(wspec((n_mid, H_pad, H_pad), lambda i: (0, 0, 0)))
            specs.append(wspec((n_mid, 1, H_pad), lambda i: (0, 0, 0)))
        specs += [wspec((H_pad, O_pad), lambda i: (0, 0)),
                  wspec((1, O_pad), lambda i: (0, 0))]
        return specs

    def run(single_buffer_weights):
        return pl.pallas_call(
            kernel,
            out_shape=jax.ShapeDtypeStruct((M_pad, O_pad), out_dtype),
            grid=(grid_m,),
            in_specs=build_in_specs(single_buffer_weights),
            out_specs=pl.BlockSpec((tm, O_pad), lambda i: (i, 0)),
            scratch_shapes=scratch_shapes,
            compiler_params=pltpu.CompilerParams(
                dimension_semantics=("parallel",),
                vmem_limit_bytes=int(vmem_limit)),
            cost_estimate=pl.CostEstimate(
                flops=flops, transcendentals=0, bytes_accessed=bytes_accessed),
        )(*operands)

    try:
        out = run(True)
    except Exception:
        # Fallback if single-buffered (Buffered(1)) constant blocks are not
        # supported by this toolchain; default double-buffering still works.
        out = run(False)

    # Padded output slice: cheap for small O; keep O_pad=128 for lane-dense vst.
    return out[:M, :O].reshape(B, pre_len, O)


# --------------------------------------------------------------------------- #
# Params init + pure-JAX reference
# --------------------------------------------------------------------------- #
def init_mlp_params(key, input_size, output_size, hidden_size, n_layers,
                    dtype=jnp.float32):
    """Deterministic synthetic parameters (uniform, like torch's default init)."""

    def linear_init(k, fan_in, fan_out):
        kw, kb = jax.random.split(k)
        bound = 1.0 / jnp.sqrt(jnp.asarray(fan_in, dtype))
        w = jax.random.uniform(kw, (fan_in, fan_out), dtype, -bound, bound)
        b = jax.random.uniform(kb, (fan_out,), dtype, -bound, bound)
        return w, b

    keys = jax.random.split(key, n_layers + 1)
    return {
        "hidden": linear_init(keys[0], input_size, hidden_size),
        "layers": [linear_init(keys[1 + i], hidden_size, hidden_size)
                   for i in range(n_layers - 1)],
        "linear": linear_init(keys[n_layers], hidden_size, output_size),
    }


def _reference_forward(params, x, pre_len):
    """Pure-JAX mirror of the PyTorch forward (eval mode)."""
    w, b = params["hidden"]
    h = jnp.maximum(x @ w + b, 0.0)
    for (w, b) in params["layers"]:
        h = jnp.maximum(h @ w + b, 0.0)
    h = jnp.maximum(h, 0.0)
    w, b = params["linear"]
    h = h @ w + b
    return h[:, -pre_len:, :]


if __name__ == "__main__":
    # Small shapes consistent with the module's forward.
    batch = 2
    obs_len = 8
    input_size = 16
    hidden_size = 32
    output_size = 4
    pre_len = 4
    n_layers = 3

    key = jax.random.PRNGKey(0)
    k_params, k_x = jax.random.split(key)

    params = init_mlp_params(k_params, input_size, output_size, hidden_size,
                             n_layers)
    x = jax.random.normal(k_x, (batch, obs_len, input_size), jnp.float32)

    y_ref = jax.block_until_ready(_reference_forward(params, x, pre_len))

    # 1) resident-weight fused path (exact eval-mode semantics, f32).
    y = jax.block_until_ready(mlp_forward(params, x, pre_len))
    assert y.shape == (batch, pre_len, output_size), y.shape
    err = float(jnp.max(jnp.abs(y - y_ref)))
    assert jnp.allclose(y, y_ref, atol=1e-2, rtol=1e-2), err

    # 2) streaming mid-layer-weight fallback path (compiled & checked here too).
    y_s = jax.block_until_ready(
        mlp_forward(params, x, pre_len, force_stream_mid=True))
    err_s = float(jnp.max(jnp.abs(y_s - y_ref)))
    assert jnp.allclose(y_s, y_ref, atol=1e-2, rtol=1e-2), err_s

    # 3) bf16 MXU-input path (f32 accumulation in-kernel), prepared params reused.
    prep_bf16 = prepare_mlp_params(params, compute_dtype=jnp.bfloat16)
    y_b = jax.block_until_ready(mlp_forward(prep_bf16, x, pre_len))
    assert y_b.shape == (batch, pre_len, output_size), y_b.shape
    err_b = float(jnp.max(jnp.abs(y_b - y_ref)))
    assert jnp.allclose(y_b, y_ref, atol=8e-2, rtol=8e-2), err_b

    print("KERNEL_OK")
</pallas_src>

<mosaic_0001>
module attributes {stable_mosaic.version = 11 : i64} {
  func.func @_mlp_resident_kernel(%arg0: i32, %arg1: memref<8x128xf32, #tpu.memory_space<vmem>>, %arg2: memref<128x128xf32, #tpu.memory_space<vmem>>, %arg3: memref<1x128xf32, #tpu.memory_space<vmem>>, %arg4: memref<2x128x128xf32, #tpu.memory_space<vmem>>, %arg5: memref<2x1x128xf32, #tpu.memory_space<vmem>>, %arg6: memref<128x128xf32, #tpu.memory_space<vmem>>, %arg7: memref<1x128xf32, #tpu.memory_space<vmem>>, %arg8: memref<8x128xf32, #tpu.memory_space<vmem>>) attributes {dimension_semantics = [#tpu.dimension_semantics<parallel>], iteration_bounds = array<i64: 1>, scalar_prefetch = 0 : i64, scratch_operands = 0 : i64, tpu.core_type = #tpu.core_type<tc>, window_params = [{transform_indices = @transform_0, window_bounds = array<i64: 8, 128>}, {pipeline_mode = #tpu.pipeline_mode<synchronous>, transform_indices = @transform_1, window_bounds = array<i64: 128, 128>}, {pipeline_mode = #tpu.pipeline_mode<synchronous>, transform_indices = @transform_2, window_bounds = array<i64: 1, 128>}, {pipeline_mode = #tpu.pipeline_mode<synchronous>, transform_indices = @transform_3, window_bounds = array<i64: 2, 128, 128>}, {pipeline_mode = #tpu.pipeline_mode<synchronous>, transform_indices = @transform_4, window_bounds = array<i64: 2, 1, 128>}, {pipeline_mode = #tpu.pipeline_mode<synchronous>, transform_indices = @transform_5, window_bounds = array<i64: 128, 128>}, {pipeline_mode = #tpu.pipeline_mode<synchronous>, transform_indices = @transform_6, window_bounds = array<i64: 1, 128>}, {transform_indices = @transform_7, window_bounds = array<i64: 8, 128>}]} {
    %c0 = arith.constant 0 : index
    %c0_0 = arith.constant 0 : index
    %0 = vector.load %arg1[%c0, %c0_0] : memref<8x128xf32, #tpu.memory_space<vmem>>, vector<8x128xf32>
    %c0_1 = arith.constant 0 : index
    %c0_2 = arith.constant 0 : index
    %1 = vector.load %arg2[%c0_1, %c0_2] : memref<128x128xf32, #tpu.memory_space<vmem>>, vector<128x128xf32>
    %cst = arith.constant dense<0.000000e+00> : vector<8x128xf32>
    %2 = tpu.matmul %0, %1, %cst {dimension_numbers = #tpu.dot_dimension_numbers<[1], [0], [0], [1], [0, 0, 1, 1], [], []>} : vector<8x128xf32>, vector<128x128xf32>, vector<8x128xf32> -> vector<8x128xf32>
    %c0_3 = arith.constant 0 : index
    %c0_4 = arith.constant 0 : index
    %3 = vector.load %arg3[%c0_3, %c0_4] : memref<1x128xf32, #tpu.memory_space<vmem>>, vector<1x128xf32>
    %4 = vector.broadcast %3 : vector<1x128xf32> to vector<8x128xf32>
    %5 = arith.addf %2, %4 : vector<8x128xf32>
    %cst_5 = arith.constant 0.000000e+00 : f32
    %6 = vector.broadcast %cst_5 : f32 to vector<8x128xf32>
    %7 = arith.maximumf %5, %6 : vector<8x128xf32>
    %c0_6 = arith.constant 0 : index
    %c0_7 = arith.constant 0 : index
    %c0_8 = arith.constant 0 : index
    %8 = vector.load %arg4[%c0_6, %c0_7, %c0_8] : memref<2x128x128xf32, #tpu.memory_space<vmem>>, vector<1x128x128xf32>
    %9 = vector.shape_cast %8 : vector<1x128x128xf32> to vector<128x128xf32>
    %cst_9 = arith.constant dense<0.000000e+00> : vector<8x128xf32>
    %10 = tpu.matmul %7, %9, %cst_9 {dimension_numbers = #tpu.dot_dimension_numbers<[1], [0], [0], [1], [0, 0, 1, 1], [], []>} : vector<8x128xf32>, vector<128x128xf32>, vector<8x128xf32> -> vector<8x128xf32>
    %c0_10 = arith.constant 0 : index
    %c0_11 = arith.constant 0 : index
    %c0_12 = arith.constant 0 : index
    %11 = vector.load %arg5[%c0_10, %c0_11, %c0_12] : memref<2x1x128xf32, #tpu.memory_space<vmem>>, vector<1x1x128xf32>
    %12 = vector.shape_cast %11 : vector<1x1x128xf32> to vector<1x128xf32>
    %13 = vector.broadcast %12 : vector<1x128xf32> to vector<8x128xf32>
    %14 = arith.addf %10, %13 : vector<8x128xf32>
    %cst_13 = arith.constant 0.000000e+00 : f32
    %15 = vector.broadcast %cst_13 : f32 to vector<8x128xf32>
    %16 = arith.maximumf %14, %15 : vector<8x128xf32>
    %c1 = arith.constant 1 : index
    %c0_14 = arith.constant 0 : index
    %c0_15 = arith.constant 0 : index
    %17 = vector.load %arg4[%c1, %c0_14, %c0_15] : memref<2x128x128xf32, #tpu.memory_space<vmem>>, vector<1x128x128xf32>
    %18 = vector.shape_cast %17 : vector<1x128x128xf32> to vector<128x128xf32>
    %cst_16 = arith.constant dense<0.000000e+00> : vector<8x128xf32>
    %19 = tpu.matmul %16, %18, %cst_16 {dimension_numbers = #tpu.dot_dimension_numbers<[1], [0], [0], [1], [0, 0, 1, 1], [], []>} : vector<8x128xf32>, vector<128x128xf32>, vector<8x128xf32> -> vector<8x128xf32>
    %c1_17 = arith.constant 1 : index
    %c0_18 = arith.constant 0 : index
    %c0_19 = arith.constant 0 : index
    %20 = vector.load %arg5[%c1_17, %c0_18, %c0_19] : memref<2x1x128xf32, #tpu.memory_space<vmem>>, vector<1x1x128xf32>
    %21 = vector.shape_cast %20 : vector<1x1x128xf32> to vector<1x128xf32>
    %22 = vector.broadcast %21 : vector<1x128xf32> to vector<8x128xf32>
    %23 = arith.addf %19, %22 : vector<8x128xf32>
    %cst_20 = arith.constant 0.000000e+00 : f32
    %24 = vector.broadcast %cst_20 : f32 to vector<8x128xf32>
    %25 = arith.maximumf %23, %24 : vector<8x128xf32>
    %c0_21 = arith.constant 0 : index
    %c0_22 = arith.constant 0 : index
    %26 = vector.load %arg6[%c0_21, %c0_22] : memref<128x128xf32, #tpu.memory_space<vmem>>, vector<128x128xf32>
    %cst_23 = arith.constant dense<0.000000e+00> : vector<8x128xf32>
    %27 = tpu.matmul %25, %26, %cst_23 {dimension_numbers = #tpu.dot_dimension_numbers<[1], [0], [0], [1], [0, 0, 1, 1], [], []>} : vector<8x128xf32>, vector<128x128xf32>, vector<8x128xf32> -> vector<8x128xf32>
    %c0_24 = arith.constant 0 : index
    %c0_25 = arith.constant 0 : index
    %28 = vector.load %arg7[%c0_24, %c0_25] : memref<1x128xf32, #tpu.memory_space<vmem>>, vector<1x128xf32>
    %29 = vector.broadcast %28 : vector<1x128xf32> to vector<8x128xf32>
    %30 = arith.addf %27, %29 : vector<8x128xf32>
    %c0_26 = arith.constant 0 : index
    %c0_27 = arith.constant 0 : index
    %31 = vector.load %arg8[%c0_26, %c0_27] : memref<8x128xf32, #tpu.memory_space<vmem>>, vector<8x128xf32>
    tpu.vector_store %arg8[%c0_26, %c0_27], %30 {strides = array<i32>} : memref<8x128xf32, #tpu.memory_space<vmem>>, vector<8x128xf32>,
    return
  }
  func.func @transform_0(%arg0: i32) -> (i32, i32) {
    %c0_i32 = arith.constant 0 : i32
    %c0_i32_0 = arith.constant 0 : i32
    return %arg0, %c0_i32 : i32, i32
  }
  func.func @transform_1(%arg0: i32) -> (i32, i32) {
    %c0_i32 = arith.constant 0 : i32
    %c0_i32_0 = arith.constant 0 : i32
    %c0_i32_1 = arith.constant 0 : i32
    return %c0_i32, %c0_i32_0 : i32, i32
  }
  func.func @transform_2(%arg0: i32) -> (i32, i32) {
    %c0_i32 = arith.constant 0 : i32
    %c0_i32_0 = arith.constant 0 : i32
    %c0_i32_1 = arith.constant 0 : i32
    return %c0_i32, %c0_i32_0 : i32, i32
  }
  func.func @transform_3(%arg0: i32) -> (i32, i32, i32) {
    %c0_i32 = arith.constant 0 : i32
    %c0_i32_0 = arith.constant 0 : i32
    %c0_i32_1 = arith.constant 0 : i32
    %c0_i32_2 = arith.constant 0 : i32
    return %c0_i32, %c0_i32_0, %c0_i32_1 : i32, i32, i32
  }
  func.func @transform_4(%arg0: i32) -> (i32, i32, i32) {
    %c0_i32 = arith.constant 0 : i32
    %c0_i32_0 = arith.constant 0 : i32
    %c0_i32_1 = arith.constant 0 : i32
    %c0_i32_2 = arith.constant 0 : i32
    return %c0_i32, %c0_i32_0, %c0_i32_1 : i32, i32, i32
  }
  func.func @transform_5(%arg0: i32) -> (i32, i32) {
    %c0_i32 = arith.constant 0 : i32
    %c0_i32_0 = arith.constant 0 : i32
    %c0_i32_1 = arith.constant 0 : i32
    return %c0_i32, %c0_i32_0 : i32, i32
  }
  func.func @transform_6(%arg0: i32) -> (i32, i32) {
    %c0_i32 = arith.constant 0 : i32
    %c0_i32_0 = arith.constant 0 : i32
    %c0_i32_1 = arith.constant 0 : i32
    return %c0_i32, %c0_i32_0 : i32, i32
  }
  func.func @transform_7(%arg0: i32) -> (i32, i32) {
    %c0_i32 = arith.constant 0 : i32
    %c0_i32_0 = arith.constant 0 : i32
    return %arg0, %c0_i32 : i32, i32
  }
}

module attributes {stable_mosaic.version = 11 : i64} {
  func.func @_mlp_resident_kernel(%arg0: i32, %arg1: memref<8x128xf32, #tpu.memory_space<vmem>>, %arg2: memref<128x128xf32, #tpu.memory_space<vmem>>, %arg3: memref<1x128xf32, #tpu.memory_space<vmem>>, %arg4: memref<2x128x128xf32, #tpu.memory_space<vmem>>, %arg5: memref<2x1x128xf32, #tpu.memory_space<vmem>>, %arg6: memref<128x128xf32, #tpu.memory_space<vmem>>, %arg7: memref<1x128xf32, #tpu.memory_space<vmem>>, %arg8: memref<8x128xf32, #tpu.memory_space<vmem>>) attributes {dimension_semantics = [#tpu.dimension_semantics<parallel>], iteration_bounds = array<i64: 1>, scalar_prefetch = 0 : i64, scratch_operands = 0 : i64, tpu.core_type = #tpu.core_type<tc>, window_params = [{transform_indices = @transform_0, window_bounds = array<i64: 8, 128>}, {pipeline_mode = #tpu.pipeline_mode<synchronous>, transform_indices = @transform_1, window_bounds = array<i64: 128, 128>}, {pipeline_mode = #tpu.pipeline_mode<synchronous>, transform_indices = @transform_2, window_bounds = array<i64: 1, 128>}, {pipeline_mode = #tpu.pipeline_mode<synchronous>, transform_indices = @transform_3, window_bounds = array<i64: 2, 128, 128>}, {pipeline_mode = #tpu.pipeline_mode<synchronous>, transform_indices = @transform_4, window_bounds = array<i64: 2, 1, 128>}, {pipeline_mode = #tpu.pipeline_mode<synchronous>, transform_indices = @transform_5, window_bounds = array<i64: 128, 128>}, {pipeline_mode = #tpu.pipeline_mode<synchronous>, transform_indices = @transform_6, window_bounds = array<i64: 1, 128>}, {transform_indices = @transform_7, window_bounds = array<i64: 8, 128>}]} {
    %c0 = arith.constant 0 : index
    %c0_0 = arith.constant 0 : index
    %0 = vector.load %arg1[%c0, %c0_0] : memref<8x128xf32, #tpu.memory_space<vmem>>, vector<8x128xf32>
    %c0_1 = arith.constant 0 : index
    %c0_2 = arith.constant 0 : index
    %1 = vector.load %arg2[%c0_1, %c0_2] : memref<128x128xf32, #tpu.memory_space<vmem>>, vector<128x128xf32>
    %cst = arith.constant dense<0.000000e+00> : vector<8x128xf32>
    %2 = tpu.matmul %0, %1, %cst {dimension_numbers = #tpu.dot_dimension_numbers<[1], [0], [0], [1], [0, 0, 1, 1], [], []>} : vector<8x128xf32>, vector<128x128xf32>, vector<8x128xf32> -> vector<8x128xf32>
    %c0_3 = arith.constant 0 : index
    %c0_4 = arith.constant 0 : index
    %3 = vector.load %arg3[%c0_3, %c0_4] : memref<1x128xf32, #tpu.memory_space<vmem>>, vector<1x128xf32>
    %4 = vector.broadcast %3 : vector<1x128xf32> to vector<8x128xf32>
    %5 = arith.addf %2, %4 : vector<8x128xf32>
    %cst_5 = arith.constant 0.000000e+00 : f32
    %6 = vector.broadcast %cst_5 : f32 to vector<8x128xf32>
    %7 = arith.maximumf %5, %6 : vector<8x128xf32>
    %c0_6 = arith.constant 0 : index
    %c0_7 = arith.constant 0 : index
    %c0_8 = arith.constant 0 : index
    %8 = vector.load %arg4[%c0_6, %c0_7, %c0_8] : memref<2x128x128xf32, #tpu.memory_space<vmem>>, vector<1x128x128xf32>
    %9 = vector.shape_cast %8 : vector<1x128x128xf32> to vector<128x128xf32>
    %cst_9 = arith.constant dense<0.000000e+00> : vector<8x128xf32>
    %10 = tpu.matmul %7, %9, %cst_9 {dimension_numbers = #tpu.dot_dimension_numbers<[1], [0], [0], [1], [0, 0, 1, 1], [], []>} : vector<8x128xf32>, vector<128x128xf32>, vector<8x128xf32> -> vector<8x128xf32>
    %c0_10 = arith.constant 0 : index
    %c0_11 = arith.constant 0 : index
    %c0_12 = arith.constant 0 : index
    %11 = vector.load %arg5[%c0_10, %c0_11, %c0_12] : memref<2x1x128xf32, #tpu.memory_space<vmem>>, vector<1x1x128xf32>
    %12 = vector.shape_cast %11 : vector<1x1x128xf32> to vector<1x128xf32>
    %13 = vector.broadcast %12 : vector<1x128xf32> to vector<8x128xf32>
    %14 = arith.addf %10, %13 : vector<8x128xf32>
    %cst_13 = arith.constant 0.000000e+00 : f32
    %15 = vector.broadcast %cst_13 : f32 to vector<8x128xf32>
    %16 = arith.maximumf %14, %15 : vector<8x128xf32>
    %c1 = arith.constant 1 : index
    %c0_14 = arith.constant 0 : index
    %c0_15 = arith.constant 0 : index
    %17 = vector.load %arg4[%c1, %c0_14, %c0_15] : memref<2x128x128xf32, #tpu.memory_space<vmem>>, vector<1x128x128xf32>
    %18 = vector.shape_cast %17 : vector<1x128x128xf32> to vector<128x128xf32>
    %cst_16 = arith.constant dense<0.000000e+00> : vector<8x128xf32>
    %19 = tpu.matmul %16, %18, %cst_16 {dimension_numbers = #tpu.dot_dimension_numbers<[1], [0], [0], [1], [0, 0, 1, 1], [], []>} : vector<8x128xf32>, vector<128x128xf32>, vector<8x128xf32> -> vector<8x128xf32>
    %c1_17 = arith.constant 1 : index
    %c0_18 = arith.constant 0 : index
    %c0_19 = arith.constant 0 : index
    %20 = vector.load %arg5[%c1_17, %c0_18, %c0_19] : memref<2x1x128xf32, #tpu.memory_space<vmem>>, vector<1x1x128xf32>
    %21 = vector.shape_cast %20 : vector<1x1x128xf32> to vector<1x128xf32>
    %22 = vector.broadcast %21 : vector<1x128xf32> to vector<8x128xf32>
    %23 = arith.addf %19, %22 : vector<8x128xf32>
    %cst_20 = arith.constant 0.000000e+00 : f32
    %24 = vector.broadcast %cst_20 : f32 to vector<8x128xf32>
    %25 = arith.maximumf %23, %24 : vector<8x128xf32>
    %c0_21 = arith.constant 0 : index
    %c0_22 = arith.constant 0 : index
    %26 = vector.load %arg6[%c0_21, %c0_22] : memref<128x128xf32, #tpu.memory_space<vmem>>, vector<128x128xf32>
    %cst_23 = arith.constant dense<0.000000e+00> : vector<8x128xf32>
    %27 = tpu.matmul %25, %26, %cst_23 {dimension_numbers = #tpu.dot_dimension_numbers<[1], [0], [0], [1], [0, 0, 1, 1], [], []>} : vector<8x128xf32>, vector<128x128xf32>, vector<8x128xf32> -> vector<8x128xf32>
    %c0_24 = arith.constant 0 : index
    %c0_25 = arith.constant 0 : index
    %28 = vector.load %arg7[%c0_24, %c0_25] : memref<1x128xf32, #tpu.memory_space<vmem>>, vector<1x128xf32>
    %29 = vector.broadcast %28 : vector<1x128xf32> to vector<8x128xf32>
    %30 = arith.addf %27, %29 : vector<8x128xf32>
    %c0_26 = arith.constant 0 : index
    %c0_27 = arith.constant 0 : index
    %31 = vector.load %arg8[%c0_26, %c0_27] : memref<8x128xf32, #tpu.memory_space<vmem>>, vector<8x128xf32>
    tpu.vector_store %arg8[%c0_26, %c0_27], %30 {strides = array<i32>} : memref<8x128xf32, #tpu.memory_space<vmem>>, vector<8x128xf32>,
    return
  }
  func.func @transform_0(%arg0: i32) -> (i32, i32) {
    %c0_i32 = arith.constant 0 : i32
    %c0_i32_0 = arith.constant 0 : i32
    return %arg0, %c0_i32 : i32, i32
  }
  func.func @transform_1(%arg0: i32) -> (i32, i32) {
    %c0_i32 = arith.constant 0 : i32
    %c0_i32_0 = arith.constant 0 : i32
    %c0_i32_1 = arith.constant 0 : i32
    return %c0_i32, %c0_i32_0 : i32, i32
  }
  func.func @transform_2(%arg0: i32) -> (i32, i32) {
    %c0_i32 = arith.constant 0 : i32
    %c0_i32_0 = arith.constant 0 : i32
    %c0_i32_1 = arith.constant 0 : i32
    return %c0_i32, %c0_i32_0 : i32, i32
  }
  func.func @transform_3(%arg0: i32) -> (i32, i32, i32) {
    %c0_i32 = arith.constant 0 : i32
    %c0_i32_0 = arith.constant 0 : i32
    %c0_i32_1 = arith.constant 0 : i32
    %c0_i32_2 = arith.constant 0 : i32
    return %c0_i32, %c0_i32_0, %c0_i32_1 : i32, i32, i32
  }
  func.func @transform_4(%arg0: i32) -> (i32, i32, i32) {
    %c0_i32 = arith.constant 0 : i32
    %c0_i32_0 = arith.constant 0 : i32
    %c0_i32_1 = arith.constant 0 : i32
    %c0_i32_2 = arith.constant 0 : i32
    return %c0_i32, %c0_i32_0, %c0_i32_1 : i32, i32, i32
  }
  func.func @transform_5(%arg0: i32) -> (i32, i32) {
    %c0_i32 = arith.constant 0 : i32
    %c0_i32_0 = arith.constant 0 : i32
    %c0_i32_1 = arith.constant 0 : i32
    return %c0_i32, %c0_i32_0 : i32, i32
  }
  func.func @transform_6(%arg0: i32) -> (i32, i32) {
    %c0_i32 = arith.constant 0 : i32
    %c0_i32_0 = arith.constant 0 : i32
    %c0_i32_1 = arith.constant 0 : i32
    return %c0_i32, %c0_i32_0 : i32, i32
  }
  func.func @transform_7(%arg0: i32) -> (i32, i32) {
    %c0_i32 = arith.constant 0 : i32
    %c0_i32_0 = arith.constant 0 : i32
    return %arg0, %c0_i32 : i32, i32
  }
}

</mosaic_0001>

<llo_original>
// kernel: tpu_custom_call.1
$region0: #{tpu_custom_call.1}
  #allocation0 [shape = 'u32[]', space=smem, size = 0x4, offset = 0x4, fixed_abs, tag = 'smem constant byte address 0x4 - core index']
  #allocation1 [shape = 'u32[144,128]{1,0:T(1,128)}', space=vmem, size = 0x12000, scoped, tag = 'internal scratch']
  %s0 = inlined_call_operand.hbm [shape: f32[8,128], index: 0, kind: input, shape index: {}]
  %s1 = inlined_call_operand.hbm [shape: f32[128,128], index: 1, kind: input, shape index: {}]
  %s2 = inlined_call_operand.vmem [shape: f32[1,128], index: 2, kind: input, shape index: {}]
  %s3 = inlined_call_operand.hbm [shape: f32[2,128,128], index: 3, kind: input, shape index: {}]
  %s4 = inlined_call_operand.vmem [shape: f32[2,1,128], index: 4, kind: input, shape index: {}]
  %s5 = inlined_call_operand.hbm [shape: f32[128,128], index: 5, kind: input, shape index: {}]
  %s6 = inlined_call_operand.vmem [shape: f32[1,128], index: 6, kind: input, shape index: {}]
  %s7 = inlined_call_operand.hbm [shape: f32[8,128], index: 7, kind: output, shape index: {}]
  %s8 = sld [smem:[#allocation0]]
  $region54: #{tpu_custom_call.1} parent=0
    _
  %s10 = ssub.s32 1, %s8
  %s11 = scalar_select 0, %s10, %s8
  $region1: #{tpu_custom_call.1} parent=0
    #allocation2 [shape = 'u8[4096]{0}', space=vmem, size = 0x1000, scoped, tag = 'input window, operand 0, single buffered']
    #allocation3 [shape = 's32[1]{0}', space=sflag, size = 0x4, scoped, tag = 'scoped memory for tpu_custom_call.1']
    #allocation4 [shape = 's32[1]{0}', space=sflag, size = 0x4, scoped, tag = 'scoped memory for tpu_custom_call.1']
    #allocation5 [shape = 'u8[65536]{0}', space=vmem, size = 0x10000, scoped, tag = 'input window, operand 1, single buffered']
    #allocation6 [shape = 's32[1]{0}', space=sflag, size = 0x4, scoped, tag = 'scoped memory for tpu_custom_call.1']
    #allocation7 [shape = 'u8[131072]{0}', space=vmem, size = 0x20000, scoped, tag = 'input window, operand 3, single buffered']
    #allocation8 [shape = 'u8[65536]{0}', space=vmem, size = 0x10000, scoped, tag = 'input window, operand 5, single buffered']
    #allocation9 [shape = 's32[1]{0}', space=sflag, size = 0x4, scoped, tag = 'scoped memory for tpu_custom_call.1']
    #allocation10 [shape = 'u8[4096]{0}', space=vmem, size = 0x1000, scoped, tag = 'output window, operand 0, single buffered']
    %12 = vsyncpa [#allocation3], 0
    %13 = vsyncpa [#allocation6], 0
    %14 = vsyncpa [#allocation9], 0
    %15 = vsyncpa [#allocation4], 0
    // Predicated region
    $region2: #{tpu_custom_call.1} parent=1 // pred_check
      _
    $region3: #{tpu_custom_call.1} parent=1 // pred_check_branch
      %17 = sbr.rel (0) target = $region5
    $region4: #{tpu_custom_call.1} parent=1 // pred_region
      %s19 = ssub.s32 128, 128
      %20 = vsyncadd [#allocation3], %s19
      %s22 = sshll.u32 [#allocation2], 4
      %s23 = int_to_ptr.vmem [resolvable:$true] %s22
      %25 = dma.hbm_to_vmem [thread:$0]  %s0, 128, %s23, [#allocation3]
    $region5: #{tpu_custom_call.1} parent=1 // pred_fallthru
      _
    // Predicated region
    $region6: #{tpu_custom_call.1} parent=1 // pred_check
      _
    $region7: #{tpu_custom_call.1} parent=1 // pred_check_branch
      %27 = sbr.rel (0) target = $region9
    $region8: #{tpu_custom_call.1} parent=1 // pred_region
      %s29 = ssub.s32 2048, 2048
      %30 = vsyncadd [#allocation6], %s29
      %s31 = sshll.u32 [#allocation5], 4
      %s32 = int_to_ptr.vmem [resolvable:$true] %s31
      %37 = dma.hbm_to_vmem [thread:$0]  %s1, 2048, %s32, [#allocation6], 128, 128, 8
    $region9: #{tpu_custom_call.1} parent=1 // pred_fallthru
      _
    // Predicated region
    $region10: #{tpu_custom_call.1} parent=1 // pred_check
      _
    $region11: #{tpu_custom_call.1} parent=1 // pred_check_branch
      %39 = sbr.rel (0) target = $region13
    $region12: #{tpu_custom_call.1} parent=1 // pred_region
      _
    $region13: #{tpu_custom_call.1} parent=1 // pred_fallthru
      _
    // Predicated region
    $region14: #{tpu_custom_call.1} parent=1 // pred_check
      _
    $region15: #{tpu_custom_call.1} parent=1 // pred_check_branch
      %41 = sbr.rel (0) target = $region17
    $region16: #{tpu_custom_call.1} parent=1 // pred_region
      %s43 = ssub.s32 4096, 4096
      %44 = vsyncadd [#allocation6], %s43
      %s45 = sshll.u32 [#allocation7], 4
      %s46 = int_to_ptr.vmem [resolvable:$true] %s45
      %51 = dma.hbm_to_vmem [thread:$0]  %s3, 4096, %s46, [#allocation6], 128, 128, 8
    $region17: #{tpu_custom_call.1} parent=1 // pred_fallthru
      _
    // Predicated region
    $region18: #{tpu_custom_call.1} parent=1 // pred_check
      _
    $region19: #{tpu_custom_call.1} parent=1 // pred_check_branch
      %53 = sbr.rel (0) target = $region21
    $region20: #{tpu_custom_call.1} parent=1 // pred_region
      _
    $region21: #{tpu_custom_call.1} parent=1 // pred_fallthru
      _
    // Predicated region
    $region22: #{tpu_custom_call.1} parent=1 // pred_check
      _
    $region23: #{tpu_custom_call.1} parent=1 // pred_check_branch
      %55 = sbr.rel (0) target = $region25
    $region24: #{tpu_custom_call.1} parent=1 // pred_region
      %s57 = ssub.s32 2048, 2048
      %58 = vsyncadd [#allocation9], %s57
      %s59 = sshll.u32 [#allocation8], 4
      %s60 = int_to_ptr.vmem [resolvable:$true] %s59
      %65 = dma.hbm_to_vmem [thread:$0]  %s5, 2048, %s60, [#allocation9], 128, 128, 8
    $region25: #{tpu_custom_call.1} parent=1 // pred_fallthru
      _
    // Predicated region
    $region26: #{tpu_custom_call.1} parent=1 // pred_check
      _
    $region27: #{tpu_custom_call.1} parent=1 // pred_check_branch
      %67 = sbr.rel (0) target = $region29
    $region28: #{tpu_custom_call.1} parent=1 // pred_region
      _
    $region29: #{tpu_custom_call.1} parent=1 // pred_fallthru
      _
    // Predicated region
    $region30: #{tpu_custom_call.1} parent=1 // pred_check
      _
    $region31: #{tpu_custom_call.1} parent=1 // pred_check_branch
      %69 = sbr.rel (0) target = $region33
    $region32: #{tpu_custom_call.1} parent=1 // pred_region
      %70 = dma.done [#allocation3], 128
    $region33: #{tpu_custom_call.1} parent=1 // pred_fallthru
      _
    // Predicated region
    $region34: #{tpu_custom_call.1} parent=1 // pred_check
      _
    $region35: #{tpu_custom_call.1} parent=1 // pred_check_branch
      %72 = sbr.rel (0) target = $region37
    $region36: #{tpu_custom_call.1} parent=1 // pred_region
      %73 = dma.done [#allocation6], 2048
    $region37: #{tpu_custom_call.1} parent=1 // pred_fallthru
      _
    // Predicated region
    $region38: #{tpu_custom_call.1} parent=1 // pred_check
      _
    $region39: #{tpu_custom_call.1} parent=1 // pred_check_branch
      %75 = sbr.rel (0) target = $region41
    $region40: #{tpu_custom_call.1} parent=1 // pred_region
      %76 = dma.done [#allocation6], 4096
    $region41: #{tpu_custom_call.1} parent=1 // pred_fallthru
      _
    // Predicated region
    $region42: #{tpu_custom_call.1} parent=1 // pred_check
      _
    $region43: #{tpu_custom_call.1} parent=1 // pred_check_branch
      %78 = sbr.rel (0) target = $region45
    $region44: #{tpu_custom_call.1} parent=1 // pred_region
      %79 = dma.done [#allocation9], 2048
    $region45: #{tpu_custom_call.1} parent=1 // pred_fallthru
      _
    %v80 = vld [vmem:[#allocation2] sm:$0xff]
    %v81 = vld [vmem:[#allocation5] sm:$0xff]
    %v82 = vld [vmem:[#allocation5 + $0x8] sm:$0xff]
    %v83 = vld [vmem:[#allocation5 + $0x10] sm:$0xff]
    %v84 = vld [vmem:[#allocation5 + $0x18] sm:$0xff]
    %v85 = vld [vmem:[#allocation5 + $0x20] sm:$0xff]
    %v86 = vld [vmem:[#allocation5 + $0x28] sm:$0xff]
    %v87 = vld [vmem:[#allocation5 + $0x30] sm:$0xff]
    %v88 = vld [vmem:[#allocation5 + $0x38] sm:$0xff]
    %v89 = vld [vmem:[#allocation5 + $0x40] sm:$0xff]
    %v90 = vld [vmem:[#allocation5 + $0x48] sm:$0xff]
    %v91 = vld [vmem:[#allocation5 + $0x50] sm:$0xff]
    %v92 = vld [vmem:[#allocation5 + $0x58] sm:$0xff]
    %v93 = vld [vmem:[#allocation5 + $0x60] sm:$0xff]
    %v94 = vld [vmem:[#allocation5 + $0x68] sm:$0xff]
    %v95 = vld [vmem:[#allocation5 + $0x70] sm:$0xff]
    %v96 = vld [vmem:[#allocation5 + $0x78] sm:$0xff]
    %v97 = vld [vmem:[%s2] sm:$0x1]
    %v99 = vlaneseq
    %v100 = vshrl.u32 %v99, 7
    %v101 = vsub.s32 0, %v100
    %v102 = vrot.slane %v97, %v101
    %104 = vmatprep.subr.mxu0 0.0
    %105 = vmatpush1.msra.mxu0 %v81
    %106 = vmatprep.subr.mxu0 0.0
    %107 = vmatpush1.msra.mxu0 %v82
    %108 = vmatprep.subr.mxu0 0.0
    %109 = vmatpush1.msra.mxu0 %v83
    %110 = vmatprep.subr.mxu0 0.0
    %111 = vmatpush1.msra.mxu0 %v84
    %112 = vmatprep.subr.mxu0 0.0
    %113 = vmatpush1.msra.mxu0 %v85
    %114 = vmatprep.subr.mxu0 0.0
    %115 = vmatpush1.msra.mxu0 %v86
    %116 = vmatprep.subr.mxu0 0.0
    %117 = vmatpush1.msra.mxu0 %v87
    %118 = vmatprep.subr.mxu0 0.0
    %119 = vmatpush1.msra.mxu0 %v88
    %120 = vmatprep.subr.mxu0 0.0
    %121 = vmatpush1.msra.mxu0 %v89
    %122 = vmatprep.subr.mxu0 0.0
    %123 = vmatpush1.msra.mxu0 %v90
    %124 = vmatprep.subr.mxu0 0.0
    %125 = vmatpush1.msra.mxu0 %v91
    %126 = vmatprep.subr.mxu0 0.0
    %127 = vmatpush1.msra.mxu0 %v92
    %128 = vmatprep.subr.mxu0 0.0
    %129 = vmatpush1.msra.mxu0 %v93
    %130 = vmatprep.subr.mxu0 0.0
    %131 = vmatpush1.msra.mxu0 %v94
    %132 = vmatprep.subr.mxu0 0.0
    %133 = vmatpush1.msra.mxu0 %v95
    %134 = vmatprep.subr.mxu0 0.0
    %135 = vmatpush1.msra.mxu0 %v96
    %136 = vmatprep.subr.mxu0 0.0
    %137 = vmatpush1.msra.mxu0 0.0
    %138 = vmatprep.subr.mxu0 0.0
    %139 = vmatpush1.msra.mxu0 0.0
    %140 = vmatprep.subr.mxu0 0.0
    %141 = vmatpush1.msra.mxu0 0.0
    %142 = vmatprep.subr.mxu0 0.0
    %143 = vmatpush1.msra.mxu0 0.0
    %144 = vmatprep.subr.mxu0 0.0
    %145 = vmatpush1.msra.mxu0 0.0
    %146 = vmatprep.subr.mxu0 0.0
    %147 = vmatpush1.msra.mxu0 0.0
    %148 = vmatprep.subr.mxu0 0.0
    %149 = vmatpush1.msra.mxu0 0.0
    %150 = vmatprep.subr.mxu0 0.0
    %151 = vmatpush1.msra.mxu0 0.0
    %152 = vmatprep.subr.mxu0 0.0
    %153 = vmatpush1.msra.mxu0 0.0
    %154 = vmatprep.subr.mxu0 0.0
    %155 = vmatpush1.msra.mxu0 0.0
    %156 = vmatprep.subr.mxu0 0.0
    %157 = vmatpush1.msra.mxu0 0.0
    %158 = vmatprep.subr.mxu0 0.0
    %159 = vmatpush1.msra.mxu0 0.0
    %160 = vmatprep.subr.mxu0 0.0
    %161 = vmatpush1.msra.mxu0 0.0
    %162 = vmatprep.subr.mxu0 0.0
    %163 = vmatpush1.msra.mxu0 0.0
    %164 = vmatprep.subr.mxu0 0.0
    %165 = vmatpush1.msra.mxu0 0.0
    %166 = vmatprep.subr.mxu0 0.0
    %167 = vmatpush1.msra.mxu0 0.0
    %168 = vmatprep.mubr.f32.mxu0 0.0
    %169 = vmatmul.mubr.f32.gmra.mrb[0].mxu0 %v80
    %v170 = vpop.f32.mrb[0].mxu0
    %v171 = vadd.f32 %v102, %v170
    %v172 = vpop.f32.mrb[0].mxu0
    %173 = vdwg.mxu0
    %v174 = vmax.f32 %v171, 0.0
    %v175 = vld [vmem:[#allocation7] sm:$0xff]
    %v176 = vld [vmem:[#allocation7 + $0x8] sm:$0xff]
    %v177 = vld [vmem:[#allocation7 + $0x10] sm:$0xff]
    %v178 = vld [vmem:[#allocation7 + $0x18] sm:$0xff]
    %v179 = vld [vmem:[#allocation7 + $0x20] sm:$0xff]
    %v180 = vld [vmem:[#allocation7 + $0x28] sm:$0xff]
    %v181 = vld [vmem:[#allocation7 + $0x30] sm:$0xff]
    %v182 = vld [vmem:[#allocation7 + $0x38] sm:$0xff]
    %v183 = vld [vmem:[#allocation7 + $0x40] sm:$0xff]
    %v184 = vld [vmem:[#allocation7 + $0x48] sm:$0xff]
    %v185 = vld [vmem:[#allocation7 + $0x50] sm:$0xff]
    %v186 = vld [vmem:[#allocation7 + $0x58] sm:$0xff]
    %v187 = vld [vmem:[#allocation7 + $0x60] sm:$0xff]
    %v188 = vld [vmem:[#allocation7 + $0x68] sm:$0xff]
    %v189 = vld [vmem:[#allocation7 + $0x70] sm:$0xff]
    %v190 = vld [vmem:[#allocation7 + $0x78] sm:$0xff]
    %v191 = vld [vmem:[%s4] sm:$0x1]
    %v193 = vlaneseq
    %v194 = vshrl.u32 %v193, 7
    %v195 = vsub.s32 0, %v194
    %v196 = vrot.slane %v191, %v195
    %198 = vmatprep.subr.mxu0 0.0
    %199 = vmatpush1.msra.mxu0 %v175
    %200 = vmatprep.subr.mxu0 0.0
    %201 = vmatpush1.msra.mxu0 %v176
    %202 = vmatprep.subr.mxu0 0.0
    %203 = vmatpush1.msra.mxu0 %v177
    %204 = vmatprep.subr.mxu0 0.0
    %205 = vmatpush1.msra.mxu0 %v178
    %206 = vmatprep.subr.mxu0 0.0
    %207 = vmatpush1.msra.mxu0 %v179
    %208 = vmatprep.subr.mxu0 0.0
    %209 = vmatpush1.msra.mxu0 %v180
    %210 = vmatprep.subr.mxu0 0.0
    %211 = vmatpush1.msra.mxu0 %v181
    %212 = vmatprep.subr.mxu0 0.0
    %213 = vmatpush1.msra.mxu0 %v182
    %214 = vmatprep.subr.mxu0 0.0
    %215 = vmatpush1.msra.mxu0 %v183
    %216 = vmatprep.subr.mxu0 0.0
    %217 = vmatpush1.msra.mxu0 %v184
    %218 = vmatprep.subr.mxu0 0.0
    %219 = vmatpush1.msra.mxu0 %v185
    %220 = vmatprep.subr.mxu0 0.0
    %221 = vmatpush1.msra.mxu0 %v186
    %222 = vmatprep.subr.mxu0 0.0
    %223 = vmatpush1.msra.mxu0 %v187
    %224 = vmatprep.subr.mxu0 0.0
    %225 = vmatpush1.msra.mxu0 %v188
    %226 = vmatprep.subr.mxu0 0.0
    %227 = vmatpush1.msra.mxu0 %v189
    %228 = vmatprep.subr.mxu0 0.0
    %229 = vmatpush1.msra.mxu0 %v190
    %230 = vmatprep.subr.mxu0 0.0
    %231 = vmatpush1.msra.mxu0 0.0
    %232 = vmatprep.subr.mxu0 0.0
    %233 = vmatpush1.msra.mxu0 0.0
    %234 = vmatprep.subr.mxu0 0.0
    %235 = vmatpush1.msra.mxu0 0.0
    %236 = vmatprep.subr.mxu0 0.0
    %237 = vmatpush1.msra.mxu0 0.0
    %238 = vmatprep.subr.mxu0 0.0
    %239 = vmatpush1.msra.mxu0 0.0
    %240 = vmatprep.subr.mxu0 0.0
    %241 = vmatpush1.msra.mxu0 0.0
    %242 = vmatprep.subr.mxu0 0.0
    %243 = vmatpush1.msra.mxu0 0.0
    %244 = vmatprep.subr.mxu0 0.0
    %245 = vmatpush1.msra.mxu0 0.0
    %246 = vmatprep.subr.mxu0 0.0
    %247 = vmatpush1.msra.mxu0 0.0
    %248 = vmatprep.subr.mxu0 0.0
    %249 = vmatpush1.msra.mxu0 0.0
    %250 = vmatprep.subr.mxu0 0.0
    %251 = vmatpush1.msra.mxu0 0.0
    %252 = vmatprep.subr.mxu0 0.0
    %253 = vmatpush1.msra.mxu0 0.0
    %254 = vmatprep.subr.mxu0 0.0
    %255 = vmatpush1.msra.mxu0 0.0
    %256 = vmatprep.subr.mxu0 0.0
    %257 = vmatpush1.msra.mxu0 0.0
    %258 = vmatprep.subr.mxu0 0.0
    %259 = vmatpush1.msra.mxu0 0.0
    %260 = vmatprep.subr.mxu0 0.0
    %261 = vmatpush1.msra.mxu0 0.0
    %262 = vmatprep.mubr.f32.mxu0 0.0
    %263 = vmatmul.mubr.f32.gmra.mrb[0].mxu0 %v174
    %v264 = vpop.f32.mrb[0].mxu0
    %v265 = vadd.f32 %v196, %v264
    %v266 = vpop.f32.mrb[0].mxu0
    %267 = vdwg.mxu0
    %v268 = vmax.f32 %v265, 0.0
    %s269 = scalar_lea.vmem [#allocation7], 128
    %v270 = vld [vmem:[%s269] sm:$0xff]
    %v271 = vld [vmem:[%s269 + $0x8] sm:$0xff]
    %v272 = vld [vmem:[%s269 + $0x10] sm:$0xff]
    %v273 = vld [vmem:[%s269 + $0x18] sm:$0xff]
    %v274 = vld [vmem:[%s269 + $0x20] sm:$0xff]
    %v275 = vld [vmem:[%s269 + $0x28] sm:$0xff]
    %v276 = vld [vmem:[%s269 + $0x30] sm:$0xff]
    %v277 = vld [vmem:[%s269 + $0x38] sm:$0xff]
    %v278 = vld [vmem:[%s269 + $0x40] sm:$0xff]
    %v279 = vld [vmem:[%s269 + $0x48] sm:$0xff]
    %v280 = vld [vmem:[%s269 + $0x50] sm:$0xff]
    %v281 = vld [vmem:[%s269 + $0x58] sm:$0xff]
    %v282 = vld [vmem:[%s269 + $0x60] sm:$0xff]
    %v283 = vld [vmem:[%s269 + $0x68] sm:$0xff]
    %v284 = vld [vmem:[%s269 + $0x70] sm:$0xff]
    %v285 = vld [vmem:[%s269 + $0x78] sm:$0xff]
    %s286 = scalar_lea.vmem %s4, 1
    %v287 = vld [vmem:[%s286] sm:$0x1]
    %v289 = vlaneseq
    %v290 = vshrl.u32 %v289, 7
    %v291 = vsub.s32 0, %v290
    %v292 = vrot.slane %v287, %v291
    %294 = vmatprep.subr.mxu0 0.0
    %295 = vmatpush1.msra.mxu0 %v270
    %296 = vmatprep.subr.mxu0 0.0
    %297 = vmatpush1.msra.mxu0 %v271
    %298 = vmatprep.subr.mxu0 0.0
    %299 = vmatpush1.msra.mxu0 %v272
    %300 = vmatprep.subr.mxu0 0.0
    %301 = vmatpush1.msra.mxu0 %v273
    %302 = vmatprep.subr.mxu0 0.0
    %303 = vmatpush1.msra.mxu0 %v274
    %304 = vmatprep.subr.mxu0 0.0
    %305 = vmatpush1.msra.mxu0 %v275
    %306 = vmatprep.subr.mxu0 0.0
    %307 = vmatpush1.msra.mxu0 %v276
    %308 = vmatprep.subr.mxu0 0.0
    %309 = vmatpush1.msra.mxu0 %v277
    %310 = vmatprep.subr.mxu0 0.0
    %311 = vmatpush1.msra.mxu0 %v278
    %312 = vmatprep.subr.mxu0 0.0
    %313 = vmatpush1.msra.mxu0 %v279
    %314 = vmatprep.subr.mxu0 0.0
    %315 = vmatpush1.msra.mxu0 %v280
    %316 = vmatprep.subr.mxu0 0.0
    %317 = vmatpush1.msra.mxu0 %v281
    %318 = vmatprep.subr.mxu0 0.0
    %319 = vmatpush1.msra.mxu0 %v282
    %320 = vmatprep.subr.mxu0 0.0
    %321 = vmatpush1.msra.mxu0 %v283
    %322 = vmatprep.subr.mxu0 0.0
    %323 = vmatpush1.msra.mxu0 %v284
    %324 = vmatprep.subr.mxu0 0.0
    %325 = vmatpush1.msra.mxu0 %v285
    %326 = vmatprep.subr.mxu0 0.0
    %327 = vmatpush1.msra.mxu0 0.0
    %328 = vmatprep.subr.mxu0 0.0
    %329 = vmatpush1.msra.mxu0 0.0
    %330 = vmatprep.subr.mxu0 0.0
    %331 = vmatpush1.msra.mxu0 0.0
    %332 = vmatprep.subr.mxu0 0.0
    %333 = vmatpush1.msra.mxu0 0.0
    %334 = vmatprep.subr.mxu0 0.0
    %335 = vmatpush1.msra.mxu0 0.0
    %336 = vmatprep.subr.mxu0 0.0
    %337 = vmatpush1.msra.mxu0 0.0
    %338 = vmatprep.subr.mxu0 0.0
    %339 = vmatpush1.msra.mxu0 0.0
    %340 = vmatprep.subr.mxu0 0.0
    %341 = vmatpush1.msra.mxu0 0.0
    %342 = vmatprep.subr.mxu0 0.0
    %343 = vmatpush1.msra.mxu0 0.0
    %344 = vmatprep.subr.mxu0 0.0
    %345 = vmatpush1.msra.mxu0 0.0
    %346 = vmatprep.subr.mxu0 0.0
    %347 = vmatpush1.msra.mxu0 0.0
    %348 = vmatprep.subr.mxu0 0.0
    %349 = vmatpush1.msra.mxu0 0.0
    %350 = vmatprep.subr.mxu0 0.0
    %351 = vmatpush1.msra.mxu0 0.0
    %352 = vmatprep.subr.mxu0 0.0
    %353 = vmatpush1.msra.mxu0 0.0
    %354 = vmatprep.subr.mxu0 0.0
    %355 = vmatpush1.msra.mxu0 0.0
    %356 = vmatprep.subr.mxu0 0.0
    %357 = vmatpush1.msra.mxu0 0.0
    %358 = vmatprep.mubr.f32.mxu0 0.0
    %359 = vmatmul.mubr.f32.gmra.mrb[0].mxu0 %v268
    %v360 = vpop.f32.mrb[0].mxu0
    %v361 = vadd.f32 %v292, %v360
    %v362 = vpop.f32.mrb[0].mxu0
    %363 = vdwg.mxu0
    %v364 = vmax.f32 %v361, 0.0
    %v365 = vld [vmem:[#allocation8] sm:$0xff]
    %v366 = vld [vmem:[#allocation8 + $0x8] sm:$0xff]
    %v367 = vld [vmem:[#allocation8 + $0x10] sm:$0xff]
    %v368 = vld [vmem:[#allocation8 + $0x18] sm:$0xff]
    %v369 = vld [vmem:[#allocation8 + $0x20] sm:$0xff]
    %v370 = vld [vmem:[#allocation8 + $0x28] sm:$0xff]
    %v371 = vld [vmem:[#allocation8 + $0x30] sm:$0xff]
    %v372 = vld [vmem:[#allocation8 + $0x38] sm:$0xff]
    %v373 = vld [vmem:[#allocation8 + $0x40] sm:$0xff]
    %v374 = vld [vmem:[#allocation8 + $0x48] sm:$0xff]
    %v375 = vld [vmem:[#allocation8 + $0x50] sm:$0xff]
    %v376 = vld [vmem:[#allocation8 + $0x58] sm:$0xff]
    %v377 = vld [vmem:[#allocation8 + $0x60] sm:$0xff]
    %v378 = vld [vmem:[#allocation8 + $0x68] sm:$0xff]
    %v379 = vld [vmem:[#allocation8 + $0x70] sm:$0xff]
    %v380 = vld [vmem:[#allocation8 + $0x78] sm:$0xff]
    %v381 = vld [vmem:[%s6] sm:$0x1]
    %v383 = vlaneseq
    %v384 = vshrl.u32 %v383, 7
    %v385 = vsub.s32 0, %v384
    %v386 = vrot.slane %v381, %v385
    %388 = vmatprep.subr.mxu0 0.0
    %389 = vmatpush1.msra.mxu0 %v365
    %390 = vmatprep.subr.mxu0 0.0
    %391 = vmatpush1.msra.mxu0 %v366
    %392 = vmatprep.subr.mxu0 0.0
    %393 = vmatpush1.msra.mxu0 %v367
    %394 = vmatprep.subr.mxu0 0.0
    %395 = vmatpush1.msra.mxu0 %v368
    %396 = vmatprep.subr.mxu0 0.0
    %397 = vmatpush1.msra.mxu0 %v369
    %398 = vmatprep.subr.mxu0 0.0
    %399 = vmatpush1.msra.mxu0 %v370
    %400 = vmatprep.subr.mxu0 0.0
    %401 = vmatpush1.msra.mxu0 %v371
    %402 = vmatprep.subr.mxu0 0.0
    %403 = vmatpush1.msra.mxu0 %v372
    %404 = vmatprep.subr.mxu0 0.0
    %405 = vmatpush1.msra.mxu0 %v373
    %406 = vmatprep.subr.mxu0 0.0
    %407 = vmatpush1.msra.mxu0 %v374
    %408 = vmatprep.subr.mxu0 0.0
    %409 = vmatpush1.msra.mxu0 %v375
    %410 = vmatprep.subr.mxu0 0.0
    %411 = vmatpush1.msra.mxu0 %v376
    %412 = vmatprep.subr.mxu0 0.0
    %413 = vmatpush1.msra.mxu0 %v377
    %414 = vmatprep.subr.mxu0 0.0
    %415 = vmatpush1.msra.mxu0 %v378
    %416 = vmatprep.subr.mxu0 0.0
    %417 = vmatpush1.msra.mxu0 %v379
    %418 = vmatprep.subr.mxu0 0.0
    %419 = vmatpush1.msra.mxu0 %v380
    %420 = vmatprep.subr.mxu0 0.0
    %421 = vmatpush1.msra.mxu0 0.0
    %422 = vmatprep.subr.mxu0 0.0
    %423 = vmatpush1.msra.mxu0 0.0
    %424 = vmatprep.subr.mxu0 0.0
    %425 = vmatpush1.msra.mxu0 0.0
    %426 = vmatprep.subr.mxu0 0.0
    %427 = vmatpush1.msra.mxu0 0.0
    %428 = vmatprep.subr.mxu0 0.0
    %429 = vmatpush1.msra.mxu0 0.0
    %430 = vmatprep.subr.mxu0 0.0
    %431 = vmatpush1.msra.mxu0 0.0
    %432 = vmatprep.subr.mxu0 0.0
    %433 = vmatpush1.msra.mxu0 0.0
    %434 = vmatprep.subr.mxu0 0.0
    %435 = vmatpush1.msra.mxu0 0.0
    %436 = vmatprep.subr.mxu0 0.0
    %437 = vmatpush1.msra.mxu0 0.0
    %438 = vmatprep.subr.mxu0 0.0
    %439 = vmatpush1.msra.mxu0 0.0
    %440 = vmatprep.subr.mxu0 0.0
    %441 = vmatpush1.msra.mxu0 0.0
    %442 = vmatprep.subr.mxu0 0.0
    %443 = vmatpush1.msra.mxu0 0.0
    %444 = vmatprep.subr.mxu0 0.0
    %445 = vmatpush1.msra.mxu0 0.0
    %446 = vmatprep.subr.mxu0 0.0
    %447 = vmatpush1.msra.mxu0 0.0
    %448 = vmatprep.subr.mxu0 0.0
    %449 = vmatpush1.msra.mxu0 0.0
    %450 = vmatprep.subr.mxu0 0.0
    %451 = vmatpush1.msra.mxu0 0.0
    %452 = vmatprep.mubr.f32.mxu0 0.0
    %453 = vmatmul.mubr.f32.gmra.mrb[0].mxu0 %v364
    %v454 = vpop.f32.mrb[0].mxu0
    %v455 = vadd.f32 %v386, %v454
    %v456 = vpop.f32.mrb[0].mxu0
    %457 = vdwg.mxu0
    %458 = vst [vmem:[#allocation10] sm:$0xff] %v455
    // Predicated region
    $region46: #{tpu_custom_call.1} parent=1 // pred_check
      _
    $region47: #{tpu_custom_call.1} parent=1 // pred_check_branch
      %460 = sbr.rel (0) target = $region49
    $region48: #{tpu_custom_call.1} parent=1 // pred_region
      %s462 = ssub.s32 128, 128
      %463 = vsyncadd [#allocation4], %s462
      %s465 = sshll.u32 [#allocation10], 4
      %s466 = int_to_ptr.vmem [resolvable:$true] %s465
      %468 = dma.vmem_to_hbm [thread:$0]  %s466, 128, %s7, [#allocation4]
    $region49: #{tpu_custom_call.1} parent=1 // pred_fallthru
      _
    // Predicated region
    $region50: #{tpu_custom_call.1} parent=1 // pred_check
      _
    $region51: #{tpu_custom_call.1} parent=1 // pred_check_branch
      %470 = sbr.rel (0) target = $region53
    $region52: #{tpu_custom_call.1} parent=1 // pred_region
      %471 = dma.done [#allocation4], 128
    $region53: #{tpu_custom_call.1} parent=1 // pred_fallthru
      _
    %472 = vsyncpa [#allocation3], 1
    %473 = vsyncpa [#allocation6], 1
    %474 = vsyncpa [#allocation9], 1
    %475 = vsyncpa [#allocation4], 1

// kernel: tpu_custom_call.1
$region0: #{tpu_custom_call.1}
  #allocation0 [shape = 'u32[]', space=smem, size = 0x4, offset = 0x4, fixed_abs, tag = 'smem constant byte address 0x4 - core index']
  #allocation1 [shape = 'u32[144,128]{1,0:T(1,128)}', space=vmem, size = 0x12000, scoped, tag = 'internal scratch']
  %s0 = inlined_call_operand.hbm [shape: f32[8,128], index: 0, kind: input, shape index: {}]
  %s1 = inlined_call_operand.hbm [shape: f32[128,128], index: 1, kind: input, shape index: {}]
  %s2 = inlined_call_operand.vmem [shape: f32[1,128], index: 2, kind: input, shape index: {}]
  %s3 = inlined_call_operand.hbm [shape: f32[2,128,128], index: 3, kind: input, shape index: {}]
  %s4 = inlined_call_operand.vmem [shape: f32[2,1,128], index: 4, kind: input, shape index: {}]
  %s5 = inlined_call_operand.hbm [shape: f32[128,128], index: 5, kind: input, shape index: {}]
  %s6 = inlined_call_operand.vmem [shape: f32[1,128], index: 6, kind: input, shape index: {}]
  %s7 = inlined_call_operand.hbm [shape: f32[8,128], index: 7, kind: output, shape index: {}]
  %s8 = sld [smem:[#allocation0]]
  $region54: #{tpu_custom_call.1} parent=0
    _
  %s10 = ssub.s32 1, %s8
  %s11 = scalar_select 0, %s10, %s8
  $region1: #{tpu_custom_call.1} parent=0
    #allocation2 [shape = 'u8[4096]{0}', space=vmem, size = 0x1000, scoped, tag = 'input window, operand 0, single buffered']
    #allocation3 [shape = 's32[1]{0}', space=sflag, size = 0x4, scoped, tag = 'scoped memory for tpu_custom_call.1']
    #allocation4 [shape = 's32[1]{0}', space=sflag, size = 0x4, scoped, tag = 'scoped memory for tpu_custom_call.1']
    #allocation5 [shape = 'u8[65536]{0}', space=vmem, size = 0x10000, scoped, tag = 'input window, operand 1, single buffered']
    #allocation6 [shape = 's32[1]{0}', space=sflag, size = 0x4, scoped, tag = 'scoped memory for tpu_custom_call.1']
    #allocation7 [shape = 'u8[131072]{0}', space=vmem, size = 0x20000, scoped, tag = 'input window, operand 3, single buffered']
    #allocation8 [shape = 'u8[65536]{0}', space=vmem, size = 0x10000, scoped, tag = 'input window, operand 5, single buffered']
    #allocation9 [shape = 's32[1]{0}', space=sflag, size = 0x4, scoped, tag = 'scoped memory for tpu_custom_call.1']
    #allocation10 [shape = 'u8[4096]{0}', space=vmem, size = 0x1000, scoped, tag = 'output window, operand 0, single buffered']
    %12 = vsyncpa [#allocation3], 0
    %13 = vsyncpa [#allocation6], 0
    %14 = vsyncpa [#allocation9], 0
    %15 = vsyncpa [#allocation4], 0
    // Predicated region
    $region2: #{tpu_custom_call.1} parent=1 // pred_check
      _
    $region3: #{tpu_custom_call.1} parent=1 // pred_check_branch
      %17 = sbr.rel (0) target = $region5
    $region4: #{tpu_custom_call.1} parent=1 // pred_region
      %s19 = ssub.s32 128, 128
      %20 = vsyncadd [#allocation3], %s19
      %s22 = sshll.u32 [#allocation2], 4
      %s23 = int_to_ptr.vmem [resolvable:$true] %s22
      %25 = dma.hbm_to_vmem [thread:$0]  %s0, 128, %s23, [#allocation3]
    $region5: #{tpu_custom_call.1} parent=1 // pred_fallthru
      _
    // Predicated region
    $region6: #{tpu_custom_call.1} parent=1 // pred_check
      _
    $region7: #{tpu_custom_call.1} parent=1 // pred_check_branch
      %27 = sbr.rel (0) target = $region9
    $region8: #{tpu_custom_call.1} parent=1 // pred_region
      %s29 = ssub.s32 2048, 2048
      %30 = vsyncadd [#allocation6], %s29
      %s31 = sshll.u32 [#allocation5], 4
      %s32 = int_to_ptr.vmem [resolvable:$true] %s31
      %37 = dma.hbm_to_vmem [thread:$0]  %s1, 2048, %s32, [#allocation6], 128, 128, 8
    $region9: #{tpu_custom_call.1} parent=1 // pred_fallthru
      _
    // Predicated region
    $region10: #{tpu_custom_call.1} parent=1 // pred_check
      _
    $region11: #{tpu_custom_call.1} parent=1 // pred_check_branch
      %39 = sbr.rel (0) target = $region13
    $region12: #{tpu_custom_call.1} parent=1 // pred_region
      _
    $region13: #{tpu_custom_call.1} parent=1 // pred_fallthru
      _
    // Predicated region
    $region14: #{tpu_custom_call.1} parent=1 // pred_check
      _
    $region15: #{tpu_custom_call.1} parent=1 // pred_check_branch
      %41 = sbr.rel (0) target = $region17
    $region16: #{tpu_custom_call.1} parent=1 // pred_region
      %s43 = ssub.s32 4096, 4096
      %44 = vsyncadd [#allocation6], %s43
      %s45 = sshll.u32 [#allocation7], 4
      %s46 = int_to_ptr.vmem [resolvable:$true] %s45
      %51 = dma.hbm_to_vmem [thread:$0]  %s3, 4096, %s46, [#allocation6], 128, 128, 8
    $region17: #{tpu_custom_call.1} parent=1 // pred_fallthru
      _
    // Predicated region
    $region18: #{tpu_custom_call.1} parent=1 // pred_check
      _
    $region19: #{tpu_custom_call.1} parent=1 // pred_check_branch
      %53 = sbr.rel (0) target = $region21
    $region20: #{tpu_custom_call.1} parent=1 // pred_region
      _
    $region21: #{tpu_custom_call.1} parent=1 // pred_fallthru
      _
    // Predicated region
    $region22: #{tpu_custom_call.1} parent=1 // pred_check
      _
    $region23: #{tpu_custom_call.1} parent=1 // pred_check_branch
      %55 = sbr.rel (0) target = $region25
    $region24: #{tpu_custom_call.1} parent=1 // pred_region
      %s57 = ssub.s32 2048, 2048
      %58 = vsyncadd [#allocation9], %s57
      %s59 = sshll.u32 [#allocation8], 4
      %s60 = int_to_ptr.vmem [resolvable:$true] %s59
      %65 = dma.hbm_to_vmem [thread:$0]  %s5, 2048, %s60, [#allocation9], 128, 128, 8
    $region25: #{tpu_custom_call.1} parent=1 // pred_fallthru
      _
    // Predicated region
    $region26: #{tpu_custom_call.1} parent=1 // pred_check
      _
    $region27: #{tpu_custom_call.1} parent=1 // pred_check_branch
      %67 = sbr.rel (0) target = $region29
    $region28: #{tpu_custom_call.1} parent=1 // pred_region
      _
    $region29: #{tpu_custom_call.1} parent=1 // pred_fallthru
      _
    // Predicated region
    $region30: #{tpu_custom_call.1} parent=1 // pred_check
      _
    $region31: #{tpu_custom_call.1} parent=1 // pred_check_branch
      %69 = sbr.rel (0) target = $region33
    $region32: #{tpu_custom_call.1} parent=1 // pred_region
      %70 = dma.done [#allocation3], 128
    $region33: #{tpu_custom_call.1} parent=1 // pred_fallthru
      _
    // Predicated region
    $region34: #{tpu_custom_call.1} parent=1 // pred_check
      _
    $region35: #{tpu_custom_call.1} parent=1 // pred_check_branch
      %72 = sbr.rel (0) target = $region37
    $region36: #{tpu_custom_call.1} parent=1 // pred_region
      %73 = dma.done [#allocation6], 2048
    $region37: #{tpu_custom_call.1} parent=1 // pred_fallthru
      _
    // Predicated region
    $region38: #{tpu_custom_call.1} parent=1 // pred_check
      _
    $region39: #{tpu_custom_call.1} parent=1 // pred_check_branch
      %75 = sbr.rel (0) target = $region41
    $region40: #{tpu_custom_call.1} parent=1 // pred_region
      %76 = dma.done [#allocation6], 4096
    $region41: #{tpu_custom_call.1} parent=1 // pred_fallthru
      _
    // Predicated region
    $region42: #{tpu_custom_call.1} parent=1 // pred_check
      _
    $region43: #{tpu_custom_call.1} parent=1 // pred_check_branch
      %78 = sbr.rel (0) target = $region45
    $region44: #{tpu_custom_call.1} parent=1 // pred_region
      %79 = dma.done [#allocation9], 2048
    $region45: #{tpu_custom_call.1} parent=1 // pred_fallthru
      _
    %v80 = vld [vmem:[#allocation2] sm:$0xff]
    %v81 = vld [vmem:[#allocation5] sm:$0xff]
    %v82 = vld [vmem:[#allocation5 + $0x8] sm:$0xff]
    %v83 = vld [vmem:[#allocation5 + $0x10] sm:$0xff]
    %v84 = vld [vmem:[#allocation5 + $0x18] sm:$0xff]
    %v85 = vld [vmem:[#allocation5 + $0x20] sm:$0xff]
    %v86 = vld [vmem:[#allocation5 + $0x28] sm:$0xff]
    %v87 = vld [vmem:[#allocation5 + $0x30] sm:$0xff]
    %v88 = vld [vmem:[#allocation5 + $0x38] sm:$0xff]
    %v89 = vld [vmem:[#allocation5 + $0x40] sm:$0xff]
    %v90 = vld [vmem:[#allocation5 + $0x48] sm:$0xff]
    %v91 = vld [vmem:[#allocation5 + $0x50] sm:$0xff]
    %v92 = vld [vmem:[#allocation5 + $0x58] sm:$0xff]
    %v93 = vld [vmem:[#allocation5 + $0x60] sm:$0xff]
    %v94 = vld [vmem:[#allocation5 + $0x68] sm:$0xff]
    %v95 = vld [vmem:[#allocation5 + $0x70] sm:$0xff]
    %v96 = vld [vmem:[#allocation5 + $0x78] sm:$0xff]
    %v97 = vld [vmem:[%s2] sm:$0x1]
    %v99 = vlaneseq
    %v100 = vshrl.u32 %v99, 7
    %v101 = vsub.s32 0, %v100
    %v102 = vrot.slane %v97, %v101
    %104 = vmatprep.subr.mxu0 0.0
    %105 = vmatpush1.msra.mxu0 %v81
    %106 = vmatprep.subr.mxu0 0.0
    %107 = vmatpush1.msra.mxu0 %v82
    %108 = vmatprep.subr.mxu0 0.0
    %109 = vmatpush1.msra.mxu0 %v83
    %110 = vmatprep.subr.mxu0 0.0
    %111 = vmatpush1.msra.mxu0 %v84
    %112 = vmatprep.subr.mxu0 0.0
    %113 = vmatpush1.msra.mxu0 %v85
    %114 = vmatprep.subr.mxu0 0.0
    %115 = vmatpush1.msra.mxu0 %v86
    %116 = vmatprep.subr.mxu0 0.0
    %117 = vmatpush1.msra.mxu0 %v87
    %118 = vmatprep.subr.mxu0 0.0
    %119 = vmatpush1.msra.mxu0 %v88
    %120 = vmatprep.subr.mxu0 0.0
    %121 = vmatpush1.msra.mxu0 %v89
    %122 = vmatprep.subr.mxu0 0.0
    %123 = vmatpush1.msra.mxu0 %v90
    %124 = vmatprep.subr.mxu0 0.0
    %125 = vmatpush1.msra.mxu0 %v91
    %126 = vmatprep.subr.mxu0 0.0
    %127 = vmatpush1.msra.mxu0 %v92
    %128 = vmatprep.subr.mxu0 0.0
    %129 = vmatpush1.msra.mxu0 %v93
    %130 = vmatprep.subr.mxu0 0.0
    %131 = vmatpush1.msra.mxu0 %v94
    %132 = vmatprep.subr.mxu0 0.0
    %133 = vmatpush1.msra.mxu0 %v95
    %134 = vmatprep.subr.mxu0 0.0
    %135 = vmatpush1.msra.mxu0 %v96
    %136 = vmatprep.subr.mxu0 0.0
    %137 = vmatpush1.msra.mxu0 0.0
    %138 = vmatprep.subr.mxu0 0.0
    %139 = vmatpush1.msra.mxu0 0.0
    %140 = vmatprep.subr.mxu0 0.0
    %141 = vmatpush1.msra.mxu0 0.0
    %142 = vmatprep.subr.mxu0 0.0
    %143 = vmatpush1.msra.mxu0 0.0
    %144 = vmatprep.subr.mxu0 0.0
    %145 = vmatpush1.msra.mxu0 0.0
    %146 = vmatprep.subr.mxu0 0.0
    %147 = vmatpush1.msra.mxu0 0.0
    %148 = vmatprep.subr.mxu0 0.0
    %149 = vmatpush1.msra.mxu0 0.0
    %150 = vmatprep.subr.mxu0 0.0
    %151 = vmatpush1.msra.mxu0 0.0
    %152 = vmatprep.subr.mxu0 0.0
    %153 = vmatpush1.msra.mxu0 0.0
    %154 = vmatprep.subr.mxu0 0.0
    %155 = vmatpush1.msra.mxu0 0.0
    %156 = vmatprep.subr.mxu0 0.0
    %157 = vmatpush1.msra.mxu0 0.0
    %158 = vmatprep.subr.mxu0 0.0
    %159 = vmatpush1.msra.mxu0 0.0
    %160 = vmatprep.subr.mxu0 0.0
    %161 = vmatpush1.msra.mxu0 0.0
    %162 = vmatprep.subr.mxu0 0.0
    %163 = vmatpush1.msra.mxu0 0.0
    %164 = vmatprep.subr.mxu0 0.0
    %165 = vmatpush1.msra.mxu0 0.0
    %166 = vmatprep.subr.mxu0 0.0
    %167 = vmatpush1.msra.mxu0 0.0
    %168 = vmatprep.mubr.f32.mxu0 0.0
    %169 = vmatmul.mubr.f32.gmra.mrb[0].mxu0 %v80
    %v170 = vpop.f32.mrb[0].mxu0
    %v171 = vadd.f32 %v102, %v170
    %v172 = vpop.f32.mrb[0].mxu0
    %173 = vdwg.mxu0
    %v174 = vmax.f32 %v171, 0.0
    %v175 = vld [vmem:[#allocation7] sm:$0xff]
    %v176 = vld [vmem:[#allocation7 + $0x8] sm:$0xff]
    %v177 = vld [vmem:[#allocation7 + $0x10] sm:$0xff]
    %v178 = vld [vmem:[#allocation7 + $0x18] sm:$0xff]
    %v179 = vld [vmem:[#allocation7 + $0x20] sm:$0xff]
    %v180 = vld [vmem:[#allocation7 + $0x28] sm:$0xff]
    %v181 = vld [vmem:[#allocation7 + $0x30] sm:$0xff]
    %v182 = vld [vmem:[#allocation7 + $0x38] sm:$0xff]
    %v183 = vld [vmem:[#allocation7 + $0x40] sm:$0xff]
    %v184 = vld [vmem:[#allocation7 + $0x48] sm:$0xff]
    %v185 = vld [vmem:[#allocation7 + $0x50] sm:$0xff]
    %v186 = vld [vmem:[#allocation7 + $0x58] sm:$0xff]
    %v187 = vld [vmem:[#allocation7 + $0x60] sm:$0xff]
    %v188 = vld [vmem:[#allocation7 + $0x68] sm:$0xff]
    %v189 = vld [vmem:[#allocation7 + $0x70] sm:$0xff]
    %v190 = vld [vmem:[#allocation7 + $0x78] sm:$0xff]
    %v191 = vld [vmem:[%s4] sm:$0x1]
    %v193 = vlaneseq
    %v194 = vshrl.u32 %v193, 7
    %v195 = vsub.s32 0, %v194
    %v196 = vrot.slane %v191, %v195
    %198 = vmatprep.subr.mxu0 0.0
    %199 = vmatpush1.msra.mxu0 %v175
    %200 = vmatprep.subr.mxu0 0.0
    %201 = vmatpush1.msra.mxu0 %v176
    %202 = vmatprep.subr.mxu0 0.0
    %203 = vmatpush1.msra.mxu0 %v177
    %204 = vmatprep.subr.mxu0 0.0
    %205 = vmatpush1.msra.mxu0 %v178
    %206 = vmatprep.subr.mxu0 0.0
    %207 = vmatpush1.msra.mxu0 %v179
    %208 = vmatprep.subr.mxu0 0.0
    %209 = vmatpush1.msra.mxu0 %v180
    %210 = vmatprep.subr.mxu0 0.0
    %211 = vmatpush1.msra.mxu0 %v181
    %212 = vmatprep.subr.mxu0 0.0
    %213 = vmatpush1.msra.mxu0 %v182
    %214 = vmatprep.subr.mxu0 0.0
    %215 = vmatpush1.msra.mxu0 %v183
    %216 = vmatprep.subr.mxu0 0.0
    %217 = vmatpush1.msra.mxu0 %v184
    %218 = vmatprep.subr.mxu0 0.0
    %219 = vmatpush1.msra.mxu0 %v185
    %220 = vmatprep.subr.mxu0 0.0
    %221 = vmatpush1.msra.mxu0 %v186
    %222 = vmatprep.subr.mxu0 0.0
    %223 = vmatpush1.msra.mxu0 %v187
    %224 = vmatprep.subr.mxu0 0.0
    %225 = vmatpush1.msra.mxu0 %v188
    %226 = vmatprep.subr.mxu0 0.0
    %227 = vmatpush1.msra.mxu0 %v189
    %228 = vmatprep.subr.mxu0 0.0
    %229 = vmatpush1.msra.mxu0 %v190
    %230 = vmatprep.subr.mxu0 0.0
    %231 = vmatpush1.msra.mxu0 0.0
    %232 = vmatprep.subr.mxu0 0.0
    %233 = vmatpush1.msra.mxu0 0.0
    %234 = vmatprep.subr.mxu0 0.0
    %235 = vmatpush1.msra.mxu0 0.0
    %236 = vmatprep.subr.mxu0 0.0
    %237 = vmatpush1.msra.mxu0 0.0
    %238 = vmatprep.subr.mxu0 0.0
    %239 = vmatpush1.msra.mxu0 0.0
    %240 = vmatprep.subr.mxu0 0.0
    %241 = vmatpush1.msra.mxu0 0.0
    %242 = vmatprep.subr.mxu0 0.0
    %243 = vmatpush1.msra.mxu0 0.0
    %244 = vmatprep.subr.mxu0 0.0
    %245 = vmatpush1.msra.mxu0 0.0
    %246 = vmatprep.subr.mxu0 0.0
    %247 = vmatpush1.msra.mxu0 0.0
    %248 = vmatprep.subr.mxu0 0.0
    %249 = vmatpush1.msra.mxu0 0.0
    %250 = vmatprep.subr.mxu0 0.0
    %251 = vmatpush1.msra.mxu0 0.0
    %252 = vmatprep.subr.mxu0 0.0
    %253 = vmatpush1.msra.mxu0 0.0
    %254 = vmatprep.subr.mxu0 0.0
    %255 = vmatpush1.msra.mxu0 0.0
    %256 = vmatprep.subr.mxu0 0.0
    %257 = vmatpush1.msra.mxu0 0.0
    %258 = vmatprep.subr.mxu0 0.0
    %259 = vmatpush1.msra.mxu0 0.0
    %260 = vmatprep.subr.mxu0 0.0
    %261 = vmatpush1.msra.mxu0 0.0
    %262 = vmatprep.mubr.f32.mxu0 0.0
    %263 = vmatmul.mubr.f32.gmra.mrb[0].mxu0 %v174
    %v264 = vpop.f32.mrb[0].mxu0
    %v265 = vadd.f32 %v196, %v264
    %v266 = vpop.f32.mrb[0].mxu0
    %267 = vdwg.mxu0
    %v268 = vmax.f32 %v265, 0.0
    %s269 = scalar_lea.vmem [#allocation7], 128
    %v270 = vld [vmem:[%s269] sm:$0xff]
    %v271 = vld [vmem:[%s269 + $0x8] sm:$0xff]
    %v272 = vld [vmem:[%s269 + $0x10] sm:$0xff]
    %v273 = vld [vmem:[%s269 + $0x18] sm:$0xff]
    %v274 = vld [vmem:[%s269 + $0x20] sm:$0xff]
    %v275 = vld [vmem:[%s269 + $0x28] sm:$0xff]
    %v276 = vld [vmem:[%s269 + $0x30] sm:$0xff]
    %v277 = vld [vmem:[%s269 + $0x38] sm:$0xff]
    %v278 = vld [vmem:[%s269 + $0x40] sm:$0xff]
    %v279 = vld [vmem:[%s269 + $0x48] sm:$0xff]
    %v280 = vld [vmem:[%s269 + $0x50] sm:$0xff]
    %v281 = vld [vmem:[%s269 + $0x58] sm:$0xff]
    %v282 = vld [vmem:[%s269 + $0x60] sm:$0xff]
    %v283 = vld [vmem:[%s269 + $0x68] sm:$0xff]
    %v284 = vld [vmem:[%s269 + $0x70] sm:$0xff]
    %v285 = vld [vmem:[%s269 + $0x78] sm:$0xff]
    %s286 = scalar_lea.vmem %s4, 1
    %v287 = vld [vmem:[%s286] sm:$0x1]
    %v289 = vlaneseq
    %v290 = vshrl.u32 %v289, 7
    %v291 = vsub.s32 0, %v290
    %v292 = vrot.slane %v287, %v291
    %294 = vmatprep.subr.mxu0 0.0
    %295 = vmatpush1.msra.mxu0 %v270
    %296 = vmatprep.subr.mxu0 0.0
    %297 = vmatpush1.msra.mxu0 %v271
    %298 = vmatprep.subr.mxu0 0.0
    %299 = vmatpush1.msra.mxu0 %v272
    %300 = vmatprep.subr.mxu0 0.0
    %301 = vmatpush1.msra.mxu0 %v273
    %302 = vmatprep.subr.mxu0 0.0
    %303 = vmatpush1.msra.mxu0 %v274
    %304 = vmatprep.subr.mxu0 0.0
    %305 = vmatpush1.msra.mxu0 %v275
    %306 = vmatprep.subr.mxu0 0.0
    %307 = vmatpush1.msra.mxu0 %v276
    %308 = vmatprep.subr.mxu0 0.0
    %309 = vmatpush1.msra.mxu0 %v277
    %310 = vmatprep.subr.mxu0 0.0
    %311 = vmatpush1.msra.mxu0 %v278
    %312 = vmatprep.subr.mxu0 0.0
    %313 = vmatpush1.msra.mxu0 %v279
    %314 = vmatprep.subr.mxu0 0.0
    %315 = vmatpush1.msra.mxu0 %v280
    %316 = vmatprep.subr.mxu0 0.0
    %317 = vmatpush1.msra.mxu0 %v281
    %318 = vmatprep.subr.mxu0 0.0
    %319 = vmatpush1.msra.mxu0 %v282
    %320 = vmatprep.subr.mxu0 0.0
    %321 = vmatpush1.msra.mxu0 %v283
    %322 = vmatprep.subr.mxu0 0.0
    %323 = vmatpush1.msra.mxu0 %v284
    %324 = vmatprep.subr.mxu0 0.0
    %325 = vmatpush1.msra.mxu0 %v285
    %326 = vmatprep.subr.mxu0 0.0
    %327 = vmatpush1.msra.mxu0 0.0
    %328 = vmatprep.subr.mxu0 0.0
    %329 = vmatpush1.msra.mxu0 0.0
    %330 = vmatprep.subr.mxu0 0.0
    %331 = vmatpush1.msra.mxu0 0.0
    %332 = vmatprep.subr.mxu0 0.0
    %333 = vmatpush1.msra.mxu0 0.0
    %334 = vmatprep.subr.mxu0 0.0
    %335 = vmatpush1.msra.mxu0 0.0
    %336 = vmatprep.subr.mxu0 0.0
    %337 = vmatpush1.msra.mxu0 0.0
    %338 = vmatprep.subr.mxu0 0.0
    %339 = vmatpush1.msra.mxu0 0.0
    %340 = vmatprep.subr.mxu0 0.0
    %341 = vmatpush1.msra.mxu0 0.0
    %342 = vmatprep.subr.mxu0 0.0
    %343 = vmatpush1.msra.mxu0 0.0
    %344 = vmatprep.subr.mxu0 0.0
    %345 = vmatpush1.msra.mxu0 0.0
    %346 = vmatprep.subr.mxu0 0.0
    %347 = vmatpush1.msra.mxu0 0.0
    %348 = vmatprep.subr.mxu0 0.0
    %349 = vmatpush1.msra.mxu0 0.0
    %350 = vmatprep.subr.mxu0 0.0
    %351 = vmatpush1.msra.mxu0 0.0
    %352 = vmatprep.subr.mxu0 0.0
    %353 = vmatpush1.msra.mxu0 0.0
    %354 = vmatprep.subr.mxu0 0.0
    %355 = vmatpush1.msra.mxu0 0.0
    %356 = vmatprep.subr.mxu0 0.0
    %357 = vmatpush1.msra.mxu0 0.0
    %358 = vmatprep.mubr.f32.mxu0 0.0
    %359 = vmatmul.mubr.f32.gmra.mrb[0].mxu0 %v268
    %v360 = vpop.f32.mrb[0].mxu0
    %v361 = vadd.f32 %v292, %v360
    %v362 = vpop.f32.mrb[0].mxu0
    %363 = vdwg.mxu0
    %v364 = vmax.f32 %v361, 0.0
    %v365 = vld [vmem:[#allocation8] sm:$0xff]
    %v366 = vld [vmem:[#allocation8 + $0x8] sm:$0xff]
    %v367 = vld [vmem:[#allocation8 + $0x10] sm:$0xff]
    %v368 = vld [vmem:[#allocation8 + $0x18] sm:$0xff]
    %v369 = vld [vmem:[#allocation8 + $0x20] sm:$0xff]
    %v370 = vld [vmem:[#allocation8 + $0x28] sm:$0xff]
    %v371 = vld [vmem:[#allocation8 + $0x30] sm:$0xff]
    %v372 = vld [vmem:[#allocation8 + $0x38] sm:$0xff]
    %v373 = vld [vmem:[#allocation8 + $0x40] sm:$0xff]
    %v374 = vld [vmem:[#allocation8 + $0x48] sm:$0xff]
    %v375 = vld [vmem:[#allocation8 + $0x50] sm:$0xff]
    %v376 = vld [vmem:[#allocation8 + $0x58] sm:$0xff]
    %v377 = vld [vmem:[#allocation8 + $0x60] sm:$0xff]
    %v378 = vld [vmem:[#allocation8 + $0x68] sm:$0xff]
    %v379 = vld [vmem:[#allocation8 + $0x70] sm:$0xff]
    %v380 = vld [vmem:[#allocation8 + $0x78] sm:$0xff]
    %v381 = vld [vmem:[%s6] sm:$0x1]
    %v383 = vlaneseq
    %v384 = vshrl.u32 %v383, 7
    %v385 = vsub.s32 0, %v384
    %v386 = vrot.slane %v381, %v385
    %388 = vmatprep.subr.mxu0 0.0
    %389 = vmatpush1.msra.mxu0 %v365
    %390 = vmatprep.subr.mxu0 0.0
    %391 = vmatpush1.msra.mxu0 %v366
    %392 = vmatprep.subr.mxu0 0.0
    %393 = vmatpush1.msra.mxu0 %v367
    %394 = vmatprep.subr.mxu0 0.0
    %395 = vmatpush1.msra.mxu0 %v368
    %396 = vmatprep.subr.mxu0 0.0
    %397 = vmatpush1.msra.mxu0 %v369
    %398 = vmatprep.subr.mxu0 0.0
    %399 = vmatpush1.msra.mxu0 %v370
    %400 = vmatprep.subr.mxu0 0.0
    %401 = vmatpush1.msra.mxu0 %v371
    %402 = vmatprep.subr.mxu0 0.0
    %403 = vmatpush1.msra.mxu0 %v372
    %404 = vmatprep.subr.mxu0 0.0
    %405 = vmatpush1.msra.mxu0 %v373
    %406 = vmatprep.subr.mxu0 0.0
    %407 = vmatpush1.msra.mxu0 %v374
    %408 = vmatprep.subr.mxu0 0.0
    %409 = vmatpush1.msra.mxu0 %v375
    %410 = vmatprep.subr.mxu0 0.0
    %411 = vmatpush1.msra.mxu0 %v376
    %412 = vmatprep.subr.mxu0 0.0
    %413 = vmatpush1.msra.mxu0 %v377
    %414 = vmatprep.subr.mxu0 0.0
    %415 = vmatpush1.msra.mxu0 %v378
    %416 = vmatprep.subr.mxu0 0.0
    %417 = vmatpush1.msra.mxu0 %v379
    %418 = vmatprep.subr.mxu0 0.0
    %419 = vmatpush1.msra.mxu0 %v380
    %420 = vmatprep.subr.mxu0 0.0
    %421 = vmatpush1.msra.mxu0 0.0
    %422 = vmatprep.subr.mxu0 0.0
    %423 = vmatpush1.msra.mxu0 0.0
    %424 = vmatprep.subr.mxu0 0.0
    %425 = vmatpush1.msra.mxu0 0.0
    %426 = vmatprep.subr.mxu0 0.0
    %427 = vmatpush1.msra.mxu0 0.0
    %428 = vmatprep.subr.mxu0 0.0
    %429 = vmatpush1.msra.mxu0 0.0
    %430 = vmatprep.subr.mxu0 0.0
    %431 = vmatpush1.msra.mxu0 0.0
    %432 = vmatprep.subr.mxu0 0.0
    %433 = vmatpush1.msra.mxu0 0.0
    %434 = vmatprep.subr.mxu0 0.0
    %435 = vmatpush1.msra.mxu0 0.0
    %436 = vmatprep.subr.mxu0 0.0
    %437 = vmatpush1.msra.mxu0 0.0
    %438 = vmatprep.subr.mxu0 0.0
    %439 = vmatpush1.msra.mxu0 0.0
    %440 = vmatprep.subr.mxu0 0.0
    %441 = vmatpush1.msra.mxu0 0.0
    %442 = vmatprep.subr.mxu0 0.0
    %443 = vmatpush1.msra.mxu0 0.0
    %444 = vmatprep.subr.mxu0 0.0
    %445 = vmatpush1.msra.mxu0 0.0
    %446 = vmatprep.subr.mxu0 0.0
    %447 = vmatpush1.msra.mxu0 0.0
    %448 = vmatprep.subr.mxu0 0.0
    %449 = vmatpush1.msra.mxu0 0.0
    %450 = vmatprep.subr.mxu0 0.0
    %451 = vmatpush1.msra.mxu0 0.0
    %452 = vmatprep.mubr.f32.mxu0 0.0
    %453 = vmatmul.mubr.f32.gmra.mrb[0].mxu0 %v364
    %v454 = vpop.f32.mrb[0].mxu0
    %v455 = vadd.f32 %v386, %v454
    %v456 = vpop.f32.mrb[0].mxu0
    %457 = vdwg.mxu0
    %458 = vst [vmem:[#allocation10] sm:$0xff] %v455
    // Predicated region
    $region46: #{tpu_custom_call.1} parent=1 // pred_check
      _
    $region47: #{tpu_custom_call.1} parent=1 // pred_check_branch
      %460 = sbr.rel (0) target = $region49
    $region48: #{tpu_custom_call.1} parent=1 // pred_region
      %s462 = ssub.s32 128, 128
      %463 = vsyncadd [#allocation4], %s462
      %s465 = sshll.u32 [#allocation10], 4
      %s466 = int_to_ptr.vmem [resolvable:$true] %s465
      %468 = dma.vmem_to_hbm [thread:$0]  %s466, 128, %s7, [#allocation4]
    $region49: #{tpu_custom_call.1} parent=1 // pred_fallthru
      _
    // Predicated region
    $region50: #{tpu_custom_call.1} parent=1 // pred_check
      _
    $region51: #{tpu_custom_call.1} parent=1 // pred_check_branch
      %470 = sbr.rel (0) target = $region53
    $region52: #{tpu_custom_call.1} parent=1 // pred_region
      %471 = dma.done [#allocation4], 128
    $region53: #{tpu_custom_call.1} parent=1 // pred_fallthru
      _
    %472 = vsyncpa [#allocation3], 1
    %473 = vsyncpa [#allocation6], 1
    %474 = vsyncpa [#allocation9], 1
    %475 = vsyncpa [#allocation4], 1

</llo_original>
